<compile_context>
chip_gen: v7x
topology: tpu7x:2x2x1
jax: 0.10.0
libtpu: 0.0.40
codegen_flags: <defaults>
</compile_context>

<pallas_src>
import math

import jax
import jax.numpy as jnp
from jax import lax
from jax.experimental import pallas as pl
from jax.experimental.pallas import tpu as pltpu


def _round_up(x, m):
    return ((x + m - 1) // m) * m


# ----------------------------------------------------------------------------
# Kernel 1: sequential LSTMCell recurrence (latency-bound, minimal VMEM)
# ----------------------------------------------------------------------------
def _lstm_recurrence_kernel(h0_ref,      # (Bp, Dp)        f32   initial hidden state
                            c0_ref,      # (Bp, Dp)        f32   initial cell state
                            g_ref,       # (TT, Bp, 4*Dp)  f32   precomputed emb@W_ih + b
                            w_hh_ref,    # (Dp, 4*Dp)      bf16  recurrent weight
                            h_out_ref,   # (TT, Bp, Dp)    f32   hidden states out
                            h_scr,       # (Bp, Dp)        f32   scratch (persists)
                            c_scr):      # (Bp, Dp)        f32   scratch (persists)
    Dp = h_scr.shape[1]
    TT = g_ref.shape[0]

    @pl.when(pl.program_id(0) == 0)
    def _():
        h_scr[...] = h0_ref[...]
        c_scr[...] = c0_ref[...]

    def step(k, carry):
        h, c = carry
        gates = g_ref[k] + jnp.dot(h.astype(w_hh_ref.dtype), w_hh_ref[...],
                                   preferred_element_type=jnp.float32)
        i = jax.nn.sigmoid(gates[:, 0 * Dp:1 * Dp])
        f = jax.nn.sigmoid(gates[:, 1 * Dp:2 * Dp])
        g = jnp.tanh(gates[:, 2 * Dp:3 * Dp])
        o = jax.nn.sigmoid(gates[:, 3 * Dp:4 * Dp])
        c_new = f * c + i * g
        h_new = o * jnp.tanh(c_new)
        h_out_ref[k] = h_new.astype(h_out_ref.dtype)
        return h_new, c_new

    h_fin, c_fin = lax.fori_loop(0, TT, step, (h_scr[...], c_scr[...]),
                                 unroll=True)
    h_scr[...] = h_fin
    c_scr[...] = c_fin


# ----------------------------------------------------------------------------
# Kernel 2: fc projection to vocab logits + decode-length masking (parallel)
# ----------------------------------------------------------------------------
def _fc_mask_kernel(h_ref,       # (TR, Dp)  bf16  hidden-state rows (time*batch)
                    w_fc_ref,    # (Dp, TV)  bf16  fc weight tile
                    b_fc_ref,    # (1, TV)   f32   fc bias tile
                    mask_ref,    # (TR, 1)   f32   1.0 iff decode_length[b] > t
                    out_ref):    # (TR, TV)  f32   masked logits
    logits = jnp.dot(h_ref[...], w_fc_ref[...],
                     preferred_element_type=jnp.float32) + b_fc_ref[...]
    out_ref[...] = (logits * mask_ref[...]).astype(out_ref.dtype)


# ----------------------------------------------------------------------------
# Wrapper (sorting, embedding lookup, init path, gate precompute, pallas_calls)
# ----------------------------------------------------------------------------
def decoder_with_rnn_forward(params, encoder_out, encoded_captions,
                             caption_lengths, *, time_block=4):
    B = encoder_out.shape[0]
    T_cap = encoded_captions.shape[1]
    D = params["w_hh"].shape[0]
    V = params["w_fc"].shape[1]

    enc_flat = encoder_out.reshape(B, -1).astype(jnp.float32)          # (B, Denc)

    # ---- sort by caption length, descending (matches torch .sort(descending=True))
    cap_len = caption_lengths.reshape(B).astype(jnp.int32)             # squeeze(1)
    sort_ind = jnp.argsort(-cap_len)
    cap_len_sorted = cap_len[sort_ind]
    enc_sorted = enc_flat[sort_ind]
    caps_sorted = encoded_captions[sort_ind]
    decode_lengths = cap_len_sorted - 1

    # static decode horizon (no host sync / recompilation churn)
    T_dec = T_cap - 1
    if T_dec <= 0:
        raise ValueError("captions must have length >= 2")

    # ---- padded tile sizes (sublane/lane dense)
    TT = max(1, min(time_block, T_dec))
    Bp = _round_up(B, 8)
    Dp = _round_up(D, 128)
    Vp = _round_up(V, 128)
    Tp = _round_up(T_dec, TT)

    # ---- XLA glue: embedding lookup ------------------------------------------
    emb = jnp.take(params["embedding"], caps_sorted, axis=0)           # (B, T_cap, D)
    emb = emb[:, :T_dec, :].astype(jnp.float32)

    # ---- XLA glue: init Linear -> BatchNorm1d -> first LSTM step (zero state) -
    x0 = enc_sorted @ params["w_init"] + params["b_init"]              # (B, D)
    mu = jnp.mean(x0, axis=0, keepdims=True)
    var = jnp.mean((x0 - mu) ** 2, axis=0, keepdims=True)              # biased var
    x0n = (x0 - mu) * lax.rsqrt(var + 1e-5) * params["bn_gamma"] + params["bn_beta"]
    g0 = x0n @ params["w_ih"] + params["b_lstm"]                       # h_prev = 0
    i0 = jax.nn.sigmoid(g0[:, 0 * D:1 * D])
    gg0 = jnp.tanh(g0[:, 2 * D:3 * D])
    o0 = jax.nn.sigmoid(g0[:, 3 * D:4 * D])
    c0 = i0 * gg0                                                      # c_prev = 0
    h0 = o0 * jnp.tanh(c0)

    # ---- XLA glue: input-side gate terms for all timesteps (one dense matmul) -
    gates_in = jnp.einsum("btd,dk->tbk", emb, params["w_ih"]) + params["b_lstm"]
    # -> per-gate padded layout (Tp, Bp, 4*Dp): gate k occupies [k*Dp, k*Dp + D)
    gates_in = gates_in.reshape(T_dec, B, 4, D)
    gates_in = jnp.pad(gates_in,
                       ((0, Tp - T_dec), (0, Bp - B), (0, 0), (0, Dp - D)))
    gates_in = gates_in.reshape(Tp, Bp, 4 * Dp)

    h0p = jnp.pad(h0, ((0, Bp - B), (0, Dp - D)))
    c0p = jnp.pad(c0, ((0, Bp - B), (0, Dp - D)))

    # recurrent weight with the same per-gate padded layout, bf16 for the MXU
    w_hh_p = params["w_hh"].reshape(D, 4, D)
    w_hh_p = jnp.pad(w_hh_p, ((0, Dp - D), (0, 0), (0, Dp - D)))
    w_hh_p = w_hh_p.reshape(Dp, 4 * Dp).astype(jnp.bfloat16)

    # ---- kernel 1: sequential recurrence --------------------------------------
    n_tblocks = Tp // TT
    h_seq = pl.pallas_call(
        _lstm_recurrence_kernel,
        out_shape=jax.ShapeDtypeStruct((Tp, Bp, Dp), jnp.float32),
        grid_spec=pltpu.PrefetchScalarGridSpec(
            num_scalar_prefetch=0,
            grid=(n_tblocks,),
            in_specs=[
                pl.BlockSpec((Bp, Dp), lambda t: (0, 0)),              # h0
                pl.BlockSpec((Bp, Dp), lambda t: (0, 0)),              # c0
                pl.BlockSpec((TT, Bp, 4 * Dp), lambda t: (t, 0, 0)),   # gates_in[t-block]
                pl.BlockSpec((Dp, 4 * Dp), lambda t: (0, 0)),          # w_hh
            ],
            out_specs=pl.BlockSpec((TT, Bp, Dp), lambda t: (t, 0, 0)),
            scratch_shapes=[pltpu.VMEM((Bp, Dp), jnp.float32),         # h carry
                            pltpu.VMEM((Bp, Dp), jnp.float32)],        # c carry
        ),
        compiler_params=pltpu.CompilerParams(
            dimension_semantics=("arbitrary",)),                       # true recurrence
    )(h0p, c0p, gates_in, w_hh_p)

    # ---- kernel 2: fc to vocab + masking, fully parallel -----------------------
    h_rows = h_seq.reshape(Tp * Bp, Dp).astype(jnp.bfloat16)           # (rows, Dp)
    w_fc_p = jnp.pad(params["w_fc"], ((0, Dp - D), (0, Vp - V))).astype(jnp.bfloat16)
    b_fc_p = jnp.pad(params["b_fc"], ((0, 0), (0, Vp - V)))

    dec_len_p = jnp.pad(decode_lengths, (0, Bp - B))                   # padded rows -> 0
    t_ids = jnp.arange(Tp, dtype=jnp.int32)
    row_mask = (dec_len_p[None, :] > t_ids[:, None]).astype(jnp.float32)
    row_mask = row_mask.reshape(Tp * Bp, 1)

    TR = TT * Bp                                                       # row tile
    TV = 128                                                           # vocab tile
    for cand in (512, 256, 128):
        if cand <= Vp and Vp % cand == 0:
            TV = cand
            break

    preds_rows = pl.pallas_call(
        _fc_mask_kernel,
        out_shape=jax.ShapeDtypeStruct((Tp * Bp, Vp), jnp.float32),
        grid_spec=pltpu.PrefetchScalarGridSpec(
            num_scalar_prefetch=0,
            grid=(Tp * Bp // TR, Vp // TV),
            in_specs=[
                pl.BlockSpec((TR, Dp), lambda r, v: (r, 0)),           # hidden rows
                pl.BlockSpec((Dp, TV), lambda r, v: (0, v)),           # w_fc tile
                pl.BlockSpec((1, TV), lambda r, v: (0, v)),            # b_fc tile
                pl.BlockSpec((TR, 1), lambda r, v: (r, 0)),            # mask rows
            ],
            out_specs=pl.BlockSpec((TR, TV), lambda r, v: (r, v)),
        ),
        compiler_params=pltpu.CompilerParams(
            dimension_semantics=("parallel", "parallel")),             # megacore-friendly
    )(h_rows, w_fc_p, b_fc_p, row_mask)

    predictions = preds_rows.reshape(Tp, Bp, Vp)[:T_dec, :B, :V]
    predictions = jnp.transpose(predictions, (1, 0, 2))                # (B, T_dec, V)
    return predictions, caps_sorted, decode_lengths, sort_ind


# ----------------------------------------------------------------------------
# Deterministic parameter init (mirrors the shapes from __init__)
# ----------------------------------------------------------------------------
def init_params(key, vocab_size, embed_dim, decoder_dim, encoder_dim):
    assert embed_dim == decoder_dim, "LSTMCell(input=decoder_dim) requires embed_dim == decoder_dim"
    ks = jax.random.split(key, 8)
    u = lambda k, shape, b: jax.random.uniform(k, shape, jnp.float32, -b, b)
    kd = 1.0 / math.sqrt(decoder_dim)
    ke = 1.0 / math.sqrt(encoder_dim)
    b_ih = u(ks[5], (1, 4 * decoder_dim), kd)
    b_hh = u(ks[6], (1, 4 * decoder_dim), kd)
    return {
        "embedding": u(ks[0], (vocab_size, embed_dim), 0.1),           # uniform_(-0.1, 0.1)
        "w_init":    u(ks[1], (encoder_dim, decoder_dim), ke),         # nn.Linear weight^T
        "b_init":    u(ks[2], (1, decoder_dim), ke),
        "bn_gamma":  jnp.ones((1, decoder_dim), jnp.float32),
        "bn_beta":   jnp.zeros((1, decoder_dim), jnp.float32),
        "w_ih":      u(ks[3], (decoder_dim, 4 * decoder_dim), kd),     # LSTMCell weight_ih^T (i,f,g,o)
        "w_hh":      u(ks[4], (decoder_dim, 4 * decoder_dim), kd),     # LSTMCell weight_hh^T
        "b_lstm":    b_ih + b_hh,
        "w_fc":      u(ks[7], (decoder_dim, vocab_size), 0.1),         # fc uniform_(-0.1, 0.1)
        "b_fc":      jnp.zeros((1, vocab_size), jnp.float32),          # fc bias = 0
    }


# ----------------------------------------------------------------------------
# Pure-JAX f32 reference (intended semantics of the PyTorch forward)
# ----------------------------------------------------------------------------
def _reference_forward(params, encoder_out, encoded_captions, caption_lengths):
    B = encoder_out.shape[0]
    T_cap = encoded_captions.shape[1]
    D = params["w_hh"].shape[0]
    V = params["w_fc"].shape[1]
    enc = encoder_out.reshape(B, -1).astype(jnp.float32)
    cap_len = caption_lengths.reshape(B).astype(jnp.int32)
    sort_ind = jnp.argsort(-cap_len)
    enc_s = enc[sort_ind]
    caps_s = encoded_captions[sort_ind]
    dec_len = cap_len[sort_ind] - 1
    T_dec = T_cap - 1
    emb = jnp.take(params["embedding"], caps_s, axis=0)

    def lstm(x, h, c):
        g = x @ params["w_ih"] + h @ params["w_hh"] + params["b_lstm"]
        i = jax.nn.sigmoid(g[:, :D])
        f = jax.nn.sigmoid(g[:, D:2 * D])
        gg = jnp.tanh(g[:, 2 * D:3 * D])
        o = jax.nn.sigmoid(g[:, 3 * D:])
        c = f * c + i * gg
        return o * jnp.tanh(c), c

    x0 = enc_s @ params["w_init"] + params["b_init"]
    mu = x0.mean(0, keepdims=True)
    var = ((x0 - mu) ** 2).mean(0, keepdims=True)
    x0n = (x0 - mu) * lax.rsqrt(var + 1e-5) * params["bn_gamma"] + params["bn_beta"]
    h, c = lstm(x0n, jnp.zeros((B, D), jnp.float32), jnp.zeros((B, D), jnp.float32))
    preds = jnp.zeros((B, T_dec, V), jnp.float32)
    for t in range(T_dec):
        h, c = lstm(emb[:, t, :], h, c)
        logit = h @ params["w_fc"] + params["b_fc"]
        preds = preds.at[:, t, :].set(jnp.where((dec_len > t)[:, None], logit, 0.0))
    return preds


# ----------------------------------------------------------------------------
# Demo
# ----------------------------------------------------------------------------
if __name__ == "__main__":
    B = 4
    decoder_dim = 32
    embed_dim = 32
    vocab_size = 64
    enc_h, enc_w, enc_c = 4, 4, 8                      # encoder_dim = 4*4*8 = 128
    encoder_dim = enc_h * enc_w * enc_c
    T_cap = 9

    key = jax.random.PRNGKey(0)
    kp, k1, k2 = jax.random.split(key, 3)
    params = init_params(kp, vocab_size, embed_dim, decoder_dim, encoder_dim)

    encoder_out = jax.random.normal(k1, (B, enc_h, enc_w, enc_c), jnp.float32)
    encoded_captions = jax.random.randint(k2, (B, T_cap), 0, vocab_size, dtype=jnp.int32)
    caption_lengths = jnp.array([[7], [9], [5], [8]], dtype=jnp.int32)

    fwd = jax.jit(decoder_with_rnn_forward)
    preds, caps_sorted, dec_lens, sort_ind = fwd(
        params, encoder_out, encoded_captions, caption_lengths)
    jax.block_until_ready(preds)

    assert preds.shape == (B, T_cap - 1, vocab_size)

    # correctness vs f32 reference (loose tolerance: kernels use bf16 matmul operands
    # with f32 accumulation)
    ref = _reference_forward(params, encoder_out, encoded_captions, caption_lengths)
    max_err = float(jnp.max(jnp.abs(preds - ref)))
    assert max_err < 5e-2, f"max abs error {max_err}"

    print("KERNEL_OK")
</pallas_src>

<mosaic_0001>
module attributes {stable_mosaic.version = 11 : i64} {
  func.func @_lstm_recurrence_kernel(%arg0: i32, %arg1: memref<8x128xf32, #tpu.memory_space<vmem>>, %arg2: memref<8x128xf32, #tpu.memory_space<vmem>>, %arg3: memref<4x8x512xf32, #tpu.memory_space<vmem>>, %arg4: memref<128x512xbf16, #tpu.memory_space<vmem>>, %arg5: memref<4x8x128xf32, #tpu.memory_space<vmem>>, %arg6: memref<8x128xf32, #tpu.memory_space<vmem>>, %arg7: memref<8x128xf32, #tpu.memory_space<vmem>>) attributes {dimension_semantics = [#tpu.dimension_semantics<arbitrary>], iteration_bounds = array<i64: 2>, scalar_prefetch = 0 : i64, scratch_operands = 2 : i64, tpu.core_type = #tpu.core_type<tc>, window_params = [{pipeline_mode = #tpu.pipeline_mode<synchronous>, transform_indices = @transform_0, window_bounds = array<i64: 8, 128>}, {pipeline_mode = #tpu.pipeline_mode<synchronous>, transform_indices = @transform_1, window_bounds = array<i64: 8, 128>}, {transform_indices = @transform_2, window_bounds = array<i64: 4, 8, 512>}, {pipeline_mode = #tpu.pipeline_mode<synchronous>, transform_indices = @transform_3, window_bounds = array<i64: 128, 512>}, {transform_indices = @transform_4, window_bounds = array<i64: 4, 8, 128>}]} {
    %c0_i32 = arith.constant 0 : i32
    %0 = arith.cmpi eq, %arg0, %c0_i32 : i32
    %1 = arith.extui %0 : i1 to i32
    %c0_i32_0 = arith.constant 0 : i32
    %2 = arith.cmpi ne, %1, %c0_i32_0 : i32
    scf.if %2 {
      %c0_48 = arith.constant 0 : index
      %c0_49 = arith.constant 0 : index
      %151 = vector.load %arg1[%c0_48, %c0_49] : memref<8x128xf32, #tpu.memory_space<vmem>>, vector<8x128xf32>
      %c0_50 = arith.constant 0 : index
      %c0_51 = arith.constant 0 : index
      %152 = vector.load %arg6[%c0_50, %c0_51] : memref<8x128xf32, #tpu.memory_space<vmem>>, vector<8x128xf32>
      tpu.vector_store %arg6[%c0_50, %c0_51], %151 {strides = array<i32>} : memref<8x128xf32, #tpu.memory_space<vmem>>, vector<8x128xf32>,
      %c0_52 = arith.constant 0 : index
      %c0_53 = arith.constant 0 : index
      %153 = vector.load %arg2[%c0_52, %c0_53] : memref<8x128xf32, #tpu.memory_space<vmem>>, vector<8x128xf32>
      %c0_54 = arith.constant 0 : index
      %c0_55 = arith.constant 0 : index
      %154 = vector.load %arg7[%c0_54, %c0_55] : memref<8x128xf32, #tpu.memory_space<vmem>>, vector<8x128xf32>
      tpu.vector_store %arg7[%c0_54, %c0_55], %153 {strides = array<i32>} : memref<8x128xf32, #tpu.memory_space<vmem>>, vector<8x128xf32>,
    } else {
    }
    %c0 = arith.constant 0 : index
    %c0_1 = arith.constant 0 : index
    %3 = vector.load %arg6[%c0, %c0_1] : memref<8x128xf32, #tpu.memory_space<vmem>>, vector<8x128xf32>
    %c0_2 = arith.constant 0 : index
    %c0_3 = arith.constant 0 : index
    %4 = vector.load %arg7[%c0_2, %c0_3] : memref<8x128xf32, #tpu.memory_space<vmem>>, vector<8x128xf32>
    %c0_i32_4 = arith.constant 0 : i32
    %5 = arith.index_cast %c0_i32_4 : i32 to index
    %c0_5 = arith.constant 0 : index
    %c0_6 = arith.constant 0 : index
    %6 = vector.load %arg3[%5, %c0_5, %c0_6] : memref<4x8x512xf32, #tpu.memory_space<vmem>>, vector<1x8x512xf32>
    %7 = vector.shape_cast %6 : vector<1x8x512xf32> to vector<8x512xf32>
    %8 = arith.truncf %3 : vector<8x128xf32> to vector<8x128xbf16>
    %c0_7 = arith.constant 0 : index
    %c0_8 = arith.constant 0 : index
    %9 = vector.load %arg4[%c0_7, %c0_8] : memref<128x512xbf16, #tpu.memory_space<vmem>>, vector<128x512xbf16>
    %cst = arith.constant dense<0.000000e+00> : vector<8x512xf32>
    %10 = tpu.matmul %8, %9, %cst {dimension_numbers = #tpu.dot_dimension_numbers<[1], [0], [0], [1], [0, 0, 1, 1], [], []>} : vector<8x128xbf16>, vector<128x512xbf16>, vector<8x512xf32> -> vector<8x512xf32>
    %11 = arith.addf %7, %10 : vector<8x512xf32>
    %12 = vector.extract_strided_slice %11 {offsets = [0, 0], sizes = [8, 128], strides = [1, 1]} : vector<8x512xf32> to vector<8x128xf32>
    %13 = arith.negf %12 : vector<8x128xf32>
    %14 = math.exp %13 : vector<8x128xf32>
    %cst_9 = arith.constant 1.000000e+00 : f32
    %15 = vector.broadcast %cst_9 : f32 to vector<8x128xf32>
    %16 = arith.addf %15, %14 : vector<8x128xf32>
    %17 = arith.divf %15, %16 : vector<8x128xf32>
    %18 = vector.extract_strided_slice %11 {offsets = [0, 128], sizes = [8, 128], strides = [1, 1]} : vector<8x512xf32> to vector<8x128xf32>
    %19 = arith.negf %18 : vector<8x128xf32>
    %20 = math.exp %19 : vector<8x128xf32>
    %cst_10 = arith.constant 1.000000e+00 : f32
    %21 = vector.broadcast %cst_10 : f32 to vector<8x128xf32>
    %22 = arith.addf %21, %20 : vector<8x128xf32>
    %23 = arith.divf %21, %22 : vector<8x128xf32>
    %24 = vector.extract_strided_slice %11 {offsets = [0, 256], sizes = [8, 128], strides = [1, 1]} : vector<8x512xf32> to vector<8x128xf32>
    %25 = math.tanh %24 : vector<8x128xf32>
    %26 = vector.extract_strided_slice %11 {offsets = [0, 384], sizes = [8, 128], strides = [1, 1]} : vector<8x512xf32> to vector<8x128xf32>
    %27 = arith.negf %26 : vector<8x128xf32>
    %28 = math.exp %27 : vector<8x128xf32>
    %cst_11 = arith.constant 1.000000e+00 : f32
    %29 = vector.broadcast %cst_11 : f32 to vector<8x128xf32>
    %30 = arith.addf %29, %28 : vector<8x128xf32>
    %31 = arith.divf %29, %30 : vector<8x128xf32>
    %32 = arith.mulf %23, %4 : vector<8x128xf32>
    %33 = arith.mulf %17, %25 : vector<8x128xf32>
    %34 = arith.addf %32, %33 : vector<8x128xf32>
    %35 = math.tanh %34 : vector<8x128xf32>
    %36 = arith.mulf %31, %35 : vector<8x128xf32>
    %37 = arith.index_cast %c0_i32_4 : i32 to index
    %c0_12 = arith.constant 0 : index
    %c0_13 = arith.constant 0 : index
    %38 = vector.load %arg5[%37, %c0_12, %c0_13] : memref<4x8x128xf32, #tpu.memory_space<vmem>>, vector<1x8x128xf32>
    %39 = vector.shape_cast %38 : vector<1x8x128xf32> to vector<8x128xf32>
    %40 = vector.shape_cast %36 : vector<8x128xf32> to vector<1x8x128xf32>
    tpu.vector_store %arg5[%37, %c0_12, %c0_13], %40 {strides = array<i32>} : memref<4x8x128xf32, #tpu.memory_space<vmem>>, vector<1x8x128xf32>,
    %c1_i32 = arith.constant 1 : i32
    %41 = arith.index_cast %c1_i32 : i32 to index
    %c0_14 = arith.constant 0 : index
    %c0_15 = arith.constant 0 : index
    %42 = vector.load %arg3[%41, %c0_14, %c0_15] : memref<4x8x512xf32, #tpu.memory_space<vmem>>, vector<1x8x512xf32>
    %43 = vector.shape_cast %42 : vector<1x8x512xf32> to vector<8x512xf32>
    %44 = arith.truncf %36 : vector<8x128xf32> to vector<8x128xbf16>
    %c0_16 = arith.constant 0 : index
    %c0_17 = arith.constant 0 : index
    %45 = vector.load %arg4[%c0_16, %c0_17] : memref<128x512xbf16, #tpu.memory_space<vmem>>, vector<128x512xbf16>
    %cst_18 = arith.constant dense<0.000000e+00> : vector<8x512xf32>
    %46 = tpu.matmul %44, %45, %cst_18 {dimension_numbers = #tpu.dot_dimension_numbers<[1], [0], [0], [1], [0, 0, 1, 1], [], []>} : vector<8x128xbf16>, vector<128x512xbf16>, vector<8x512xf32> -> vector<8x512xf32>
    %47 = arith.addf %43, %46 : vector<8x512xf32>
    %48 = vector.extract_strided_slice %47 {offsets = [0, 0], sizes = [8, 128], strides = [1, 1]} : vector<8x512xf32> to vector<8x128xf32>
    %49 = arith.negf %48 : vector<8x128xf32>
    %50 = math.exp %49 : vector<8x128xf32>
    %cst_19 = arith.constant 1.000000e+00 : f32
    %51 = vector.broadcast %cst_19 : f32 to vector<8x128xf32>
    %52 = arith.addf %51, %50 : vector<8x128xf32>
    %53 = arith.divf %51, %52 : vector<8x128xf32>
    %54 = vector.extract_strided_slice %47 {offsets = [0, 128], sizes = [8, 128], strides = [1, 1]} : vector<8x512xf32> to vector<8x128xf32>
    %55 = arith.negf %54 : vector<8x128xf32>
    %56 = math.exp %55 : vector<8x128xf32>
    %cst_20 = arith.constant 1.000000e+00 : f32
    %57 = vector.broadcast %cst_20 : f32 to vector<8x128xf32>
    %58 = arith.addf %57, %56 : vector<8x128xf32>
    %59 = arith.divf %57, %58 : vector<8x128xf32>
    %60 = vector.extract_strided_slice %47 {offsets = [0, 256], sizes = [8, 128], strides = [1, 1]} : vector<8x512xf32> to vector<8x128xf32>
    %61 = math.tanh %60 : vector<8x128xf32>
    %62 = vector.extract_strided_slice %47 {offsets = [0, 384], sizes = [8, 128], strides = [1, 1]} : vector<8x512xf32> to vector<8x128xf32>
    %63 = arith.negf %62 : vector<8x128xf32>
    %64 = math.exp %63 : vector<8x128xf32>
    %cst_21 = arith.constant 1.000000e+00 : f32
    %65 = vector.broadcast %cst_21 : f32 to vector<8x128xf32>
    %66 = arith.addf %65, %64 : vector<8x128xf32>
    %67 = arith.divf %65, %66 : vector<8x128xf32>
    %68 = arith.mulf %59, %34 : vector<8x128xf32>
    %69 = arith.mulf %53, %61 : vector<8x128xf32>
    %70 = arith.addf %68, %69 : vector<8x128xf32>
    %71 = math.tanh %70 : vector<8x128xf32>
    %72 = arith.mulf %67, %71 : vector<8x128xf32>
    %73 = arith.index_cast %c1_i32 : i32 to index
    %c0_22 = arith.constant 0 : index
    %c0_23 = arith.constant 0 : index
    %74 = vector.load %arg5[%73, %c0_22, %c0_23] : memref<4x8x128xf32, #tpu.memory_space<vmem>>, vector<1x8x128xf32>
    %75 = vector.shape_cast %74 : vector<1x8x128xf32> to vector<8x128xf32>
    %76 = vector.shape_cast %72 : vector<8x128xf32> to vector<1x8x128xf32>
    tpu.vector_store %arg5[%73, %c0_22, %c0_23], %76 {strides = array<i32>} : memref<4x8x128xf32, #tpu.memory_space<vmem>>, vector<1x8x128xf32>,
    %c2_i32 = arith.constant 2 : i32
    %77 = arith.index_cast %c2_i32 : i32 to index
    %c0_24 = arith.constant 0 : index
    %c0_25 = arith.constant 0 : index
    %78 = vector.load %arg3[%77, %c0_24, %c0_25] : memref<4x8x512xf32, #tpu.memory_space<vmem>>, vector<1x8x512xf32>
    %79 = vector.shape_cast %78 : vector<1x8x512xf32> to vector<8x512xf32>
    %80 = arith.truncf %72 : vector<8x128xf32> to vector<8x128xbf16>
    %c0_26 = arith.constant 0 : index
    %c0_27 = arith.constant 0 : index
    %81 = vector.load %arg4[%c0_26, %c0_27] : memref<128x512xbf16, #tpu.memory_space<vmem>>, vector<128x512xbf16>
    %cst_28 = arith.constant dense<0.000000e+00> : vector<8x512xf32>
    %82 = tpu.matmul %80, %81, %cst_28 {dimension_numbers = #tpu.dot_dimension_numbers<[1], [0], [0], [1], [0, 0, 1, 1], [], []>} : vector<8x128xbf16>, vector<128x512xbf16>, vector<8x512xf32> -> vector<8x512xf32>
    %83 = arith.addf %79, %82 : vector<8x512xf32>
    %84 = vector.extract_strided_slice %83 {offsets = [0, 0], sizes = [8, 128], strides = [1, 1]} : vector<8x512xf32> to vector<8x128xf32>
    %85 = arith.negf %84 : vector<8x128xf32>
    %86 = math.exp %85 : vector<8x128xf32>
    %cst_29 = arith.constant 1.000000e+00 : f32
    %87 = vector.broadcast %cst_29 : f32 to vector<8x128xf32>
    %88 = arith.addf %87, %86 : vector<8x128xf32>
    %89 = arith.divf %87, %88 : vector<8x128xf32>
    %90 = vector.extract_strided_slice %83 {offsets = [0, 128], sizes = [8, 128], strides = [1, 1]} : vector<8x512xf32> to vector<8x128xf32>
    %91 = arith.negf %90 : vector<8x128xf32>
    %92 = math.exp %91 : vector<8x128xf32>
    %cst_30 = arith.constant 1.000000e+00 : f32
    %93 = vector.broadcast %cst_30 : f32 to vector<8x128xf32>
    %94 = arith.addf %93, %92 : vector<8x128xf32>
    %95 = arith.divf %93, %94 : vector<8x128xf32>
    %96 = vector.extract_strided_slice %83 {offsets = [0, 256], sizes = [8, 128], strides = [1, 1]} : vector<8x512xf32> to vector<8x128xf32>
    %97 = math.tanh %96 : vector<8x128xf32>
    %98 = vector.extract_strided_slice %83 {offsets = [0, 384], sizes = [8, 128], strides = [1, 1]} : vector<8x512xf32> to vector<8x128xf32>
    %99 = arith.negf %98 : vector<8x128xf32>
    %100 = math.exp %99 : vector<8x128xf32>
    %cst_31 = arith.constant 1.000000e+00 : f32
    %101 = vector.broadcast %cst_31 : f32 to vector<8x128xf32>
    %102 = arith.addf %101, %100 : vector<8x128xf32>
    %103 = arith.divf %101, %102 : vector<8x128xf32>
    %104 = arith.mulf %95, %70 : vector<8x128xf32>
    %105 = arith.mulf %89, %97 : vector<8x128xf32>
    %106 = arith.addf %104, %105 : vector<8x128xf32>
    %107 = math.tanh %106 : vector<8x128xf32>
    %108 = arith.mulf %103, %107 : vector<8x128xf32>
    %109 = arith.index_cast %c2_i32 : i32 to index
    %c0_32 = arith.constant 0 : index
    %c0_33 = arith.constant 0 : index
    %110 = vector.load %arg5[%109, %c0_32, %c0_33] : memref<4x8x128xf32, #tpu.memory_space<vmem>>, vector<1x8x128xf32>
    %111 = vector.shape_cast %110 : vector<1x8x128xf32> to vector<8x128xf32>
    %112 = vector.shape_cast %108 : vector<8x128xf32> to vector<1x8x128xf32>
    tpu.vector_store %arg5[%109, %c0_32, %c0_33], %112 {strides = array<i32>} : memref<4x8x128xf32, #tpu.memory_space<vmem>>, vector<1x8x128xf32>,
    %c3_i32 = arith.constant 3 : i32
    %113 = arith.index_cast %c3_i32 : i32 to index
    %c0_34 = arith.constant 0 : index
    %c0_35 = arith.constant 0 : index
    %114 = vector.load %arg3[%113, %c0_34, %c0_35] : memref<4x8x512xf32, #tpu.memory_space<vmem>>, vector<1x8x512xf32>
    %115 = vector.shape_cast %114 : vector<1x8x512xf32> to vector<8x512xf32>
    %116 = arith.truncf %108 : vector<8x128xf32> to vector<8x128xbf16>
    %c0_36 = arith.constant 0 : index
    %c0_37 = arith.constant 0 : index
    %117 = vector.load %arg4[%c0_36, %c0_37] : memref<128x512xbf16, #tpu.memory_space<vmem>>, vector<128x512xbf16>
    %cst_38 = arith.constant dense<0.000000e+00> : vector<8x512xf32>
    %118 = tpu.matmul %116, %117, %cst_38 {dimension_numbers = #tpu.dot_dimension_numbers<[1], [0], [0], [1], [0, 0, 1, 1], [], []>} : vector<8x128xbf16>, vector<128x512xbf16>, vector<8x512xf32> -> vector<8x512xf32>
    %119 = arith.addf %115, %118 : vector<8x512xf32>
    %120 = vector.extract_strided_slice %119 {offsets = [0, 0], sizes = [8, 128], strides = [1, 1]} : vector<8x512xf32> to vector<8x128xf32>
    %121 = arith.negf %120 : vector<8x128xf32>
    %122 = math.exp %121 : vector<8x128xf32>
    %cst_39 = arith.constant 1.000000e+00 : f32
    %123 = vector.broadcast %cst_39 : f32 to vector<8x128xf32>
    %124 = arith.addf %123, %122 : vector<8x128xf32>
    %125 = arith.divf %123, %124 : vector<8x128xf32>
    %126 = vector.extract_strided_slice %119 {offsets = [0, 128], sizes = [8, 128], strides = [1, 1]} : vector<8x512xf32> to vector<8x128xf32>
    %127 = arith.negf %126 : vector<8x128xf32>
    %128 = math.exp %127 : vector<8x128xf32>
    %cst_40 = arith.constant 1.000000e+00 : f32
    %129 = vector.broadcast %cst_40 : f32 to vector<8x128xf32>
    %130 = arith.addf %129, %128 : vector<8x128xf32>
    %131 = arith.divf %129, %130 : vector<8x128xf32>
    %132 = vector.extract_strided_slice %119 {offsets = [0, 256], sizes = [8, 128], strides = [1, 1]} : vector<8x512xf32> to vector<8x128xf32>
    %133 = math.tanh %132 : vector<8x128xf32>
    %134 = vector.extract_strided_slice %119 {offsets = [0, 384], sizes = [8, 128], strides = [1, 1]} : vector<8x512xf32> to vector<8x128xf32>
    %135 = arith.negf %134 : vector<8x128xf32>
    %136 = math.exp %135 : vector<8x128xf32>
    %cst_41 = arith.constant 1.000000e+00 : f32
    %137 = vector.broadcast %cst_41 : f32 to vector<8x128xf32>
    %138 = arith.addf %137, %136 : vector<8x128xf32>
    %139 = arith.divf %137, %138 : vector<8x128xf32>
    %140 = arith.mulf %131, %106 : vector<8x128xf32>
    %141 = arith.mulf %125, %133 : vector<8x128xf32>
    %142 = arith.addf %140, %141 : vector<8x128xf32>
    %143 = math.tanh %142 : vector<8x128xf32>
    %144 = arith.mulf %139, %143 : vector<8x128xf32>
    %145 = arith.index_cast %c3_i32 : i32 to index
    %c0_42 = arith.constant 0 : index
    %c0_43 = arith.constant 0 : index
    %146 = vector.load %arg5[%145, %c0_42, %c0_43] : memref<4x8x128xf32, #tpu.memory_space<vmem>>, vector<1x8x128xf32>
    %147 = vector.shape_cast %146 : vector<1x8x128xf32> to vector<8x128xf32>
    %148 = vector.shape_cast %144 : vector<8x128xf32> to vector<1x8x128xf32>
    tpu.vector_store %arg5[%145, %c0_42, %c0_43], %148 {strides = array<i32>} : memref<4x8x128xf32, #tpu.memory_space<vmem>>, vector<1x8x128xf32>,
    %c4_i32 = arith.constant 4 : i32
    %c0_44 = arith.constant 0 : index
    %c0_45 = arith.constant 0 : index
    %149 = vector.load %arg6[%c0_44, %c0_45] : memref<8x128xf32, #tpu.memory_space<vmem>>, vector<8x128xf32>
    tpu.vector_store %arg6[%c0_44, %c0_45], %144 {strides = array<i32>} : memref<8x128xf32, #tpu.memory_space<vmem>>, vector<8x128xf32>,
    %c0_46 = arith.constant 0 : index
    %c0_47 = arith.constant 0 : index
    %150 = vector.load %arg7[%c0_46, %c0_47] : memref<8x128xf32, #tpu.memory_space<vmem>>, vector<8x128xf32>
    tpu.vector_store %arg7[%c0_46, %c0_47], %142 {strides = array<i32>} : memref<8x128xf32, #tpu.memory_space<vmem>>, vector<8x128xf32>,
    return
  }
  func.func @transform_0(%arg0: i32) -> (i32, i32) {
    %c0_i32 = arith.constant 0 : i32
    %c0_i32_0 = arith.constant 0 : i32
    %c0_i32_1 = arith.constant 0 : i32
    return %c0_i32, %c0_i32_0 : i32, i32
  }
  func.func @transform_1(%arg0: i32) -> (i32, i32) {
    %c0_i32 = arith.constant 0 : i32
    %c0_i32_0 = arith.constant 0 : i32
    %c0_i32_1 = arith.constant 0 : i32
    return %c0_i32, %c0_i32_0 : i32, i32
  }
  func.func @transform_2(%arg0: i32) -> (i32, i32, i32) {
    %c0_i32 = arith.constant 0 : i32
    %c0_i32_0 = arith.constant 0 : i32
    %c0_i32_1 = arith.constant 0 : i32
    return %arg0, %c0_i32, %c0_i32_0 : i32, i32, i32
  }
  func.func @transform_3(%arg0: i32) -> (i32, i32) {
    %c0_i32 = arith.constant 0 : i32
    %c0_i32_0 = arith.constant 0 : i32
    %c0_i32_1 = arith.constant 0 : i32
    return %c0_i32, %c0_i32_0 : i32, i32
  }
  func.func @transform_4(%arg0: i32) -> (i32, i32, i32) {
    %c0_i32 = arith.constant 0 : i32
    %c0_i32_0 = arith.constant 0 : i32
    %c0_i32_1 = arith.constant 0 : i32
    return %arg0, %c0_i32, %c0_i32_0 : i32, i32, i32
  }
}

module attributes {stable_mosaic.version = 11 : i64} {
  func.func @_fc_mask_kernel(%arg0: i32, %arg1: i32, %arg2: memref<32x128xbf16, #tpu.memory_space<vmem>>, %arg3: memref<128x128xbf16, #tpu.memory_space<vmem>>, %arg4: memref<1x128xf32, #tpu.memory_space<vmem>>, %arg5: memref<32x1xf32, #tpu.memory_space<vmem>>, %arg6: memref<32x128xf32, #tpu.memory_space<vmem>>) attributes {dimension_semantics = [#tpu.dimension_semantics<parallel>, #tpu.dimension_semantics<parallel>], iteration_bounds = array<i64: 2, 1>, scalar_prefetch = 0 : i64, scratch_operands = 0 : i64, tpu.core_type = #tpu.core_type<tc>, window_params = [{transform_indices = @transform_0, window_bounds = array<i64: 32, 128>}, {transform_indices = @transform_1, window_bounds = array<i64: 128, 128>}, {transform_indices = @transform_2, window_bounds = array<i64: 1, 128>}, {transform_indices = @transform_3, window_bounds = array<i64: 32, 1>}, {transform_indices = @transform_4, window_bounds = array<i64: 32, 128>}]} {
    %c0 = arith.constant 0 : index
    %c0_0 = arith.constant 0 : index
    %0 = vector.load %arg2[%c0, %c0_0] : memref<32x128xbf16, #tpu.memory_space<vmem>>, vector<32x128xbf16>
    %c0_1 = arith.constant 0 : index
    %c0_2 = arith.constant 0 : index
    %1 = vector.load %arg3[%c0_1, %c0_2] : memref<128x128xbf16, #tpu.memory_space<vmem>>, vector<128x128xbf16>
    %cst = arith.constant dense<0.000000e+00> : vector<32x128xf32>
    %2 = tpu.matmul %0, %1, %cst {dimension_numbers = #tpu.dot_dimension_numbers<[1], [0], [0], [1], [0, 0, 1, 1], [], []>} : vector<32x128xbf16>, vector<128x128xbf16>, vector<32x128xf32> -> vector<32x128xf32>
    %c0_3 = arith.constant 0 : index
    %c0_4 = arith.constant 0 : index
    %3 = vector.load %arg4[%c0_3, %c0_4] : memref<1x128xf32, #tpu.memory_space<vmem>>, vector<1x128xf32>
    %4 = vector.broadcast %3 : vector<1x128xf32> to vector<32x128xf32>
    %5 = arith.addf %2, %4 : vector<32x128xf32>
    %c0_5 = arith.constant 0 : index
    %c0_6 = arith.constant 0 : index
    %6 = vector.load %arg5[%c0_5, %c0_6] : memref<32x1xf32, #tpu.memory_space<vmem>>, vector<32x1xf32>
    %7 = vector.broadcast %6 : vector<32x1xf32> to vector<32x128xf32>
    %8 = arith.mulf %5, %7 : vector<32x128xf32>
    %c0_7 = arith.constant 0 : index
    %c0_8 = arith.constant 0 : index
    %9 = vector.load %arg6[%c0_7, %c0_8] : memref<32x128xf32, #tpu.memory_space<vmem>>, vector<32x128xf32>
    tpu.vector_store %arg6[%c0_7, %c0_8], %8 {strides = array<i32>} : memref<32x128xf32, #tpu.memory_space<vmem>>, vector<32x128xf32>,
    return
  }
  func.func @transform_0(%arg0: i32, %arg1: i32) -> (i32, i32) {
    %c0_i32 = arith.constant 0 : i32
    %c0_i32_0 = arith.constant 0 : i32
    return %arg0, %c0_i32 : i32, i32
  }
  func.func @transform_1(%arg0: i32, %arg1: i32) -> (i32, i32) {
    %c0_i32 = arith.constant 0 : i32
    %c0_i32_0 = arith.constant 0 : i32
    return %c0_i32, %arg1 : i32, i32
  }
  func.func @transform_2(%arg0: i32, %arg1: i32) -> (i32, i32) {
    %c0_i32 = arith.constant 0 : i32
    %c0_i32_0 = arith.constant 0 : i32
    return %c0_i32, %arg1 : i32, i32
  }
  func.func @transform_3(%arg0: i32, %arg1: i32) -> (i32, i32) {
    %c0_i32 = arith.constant 0 : i32
    %c0_i32_0 = arith.constant 0 : i32
    return %arg0, %c0_i32 : i32, i32
  }
  func.func @transform_4(%arg0: i32, %arg1: i32) -> (i32, i32) {
    %c0_i32 = arith.constant 0 : i32
    return %arg0, %arg1 : i32, i32
  }
}

</mosaic_0001>

<llo_original>
// kernel: decoder_with_rnn_forward.3
$region0: #{decoder_with_rnn_forward.3}
  #allocation0 [shape = 'u32[]', space=smem, size = 0x4, offset = 0x4, fixed_abs, tag = 'smem constant byte address 0x4 - core index']
  #allocation1 [shape = 'u32[144,128]{1,0:T(1,128)}', space=vmem, size = 0x12000, scoped, tag = 'internal scratch']
  %s0 = inlined_call_operand.vmem [shape: bf16[64,128], index: 0, kind: input, shape index: {}]
  %s1 = inlined_call_operand.vmem [shape: bf16[128,128], index: 1, kind: input, shape index: {}]
  %s2 = inlined_call_operand.vmem [shape: f32[1,128], index: 2, kind: input, shape index: {}]
  %s3 = inlined_call_operand.vmem [shape: f32[64,1], index: 3, kind: input, shape index: {}]
  %s4 = inlined_call_operand.vmem [shape: f32[64,128], index: 4, kind: output, shape index: {}]
  %s5 = sld [smem:[#allocation0]]
  $region49: #{decoder_with_rnn_forward.3} parent=0
    _
  %s7 = ssub.s32 1, %s5
  %s8 = scalar_select 0, %s7, %s5
  loop: start=0, step=1, limit=4
  $region2: #{decoder_with_rnn_forward.3} parent=0 // loop_pre_header
    _
  $region3: #{decoder_with_rnn_forward.3} parent=0 // loop_header
    %s10 = sphi 0, %s14
    %p11 = scmp.ge.s32.totalorder %s10, 4
    %s17 = sphi 0, %s29
    %s18 = sphi 0, %s25
    %s19 = sphi 0, %s17
    %s20 = sphi 0, %s18
    %s21 = sphi 0, %s19
    %s22 = sphi 0, %s20
    %s32 = sphi 0, %s34
    %s35 = sphi 0, %s32
    %s36 = sphi 0, %s35
    %s52 = sphi 0, %s36
    %s58 = sphi 0, %s60
    %s61 = sphi 0, %s58
    %s62 = sphi 0, %s61
    %s78 = sphi 0, %s62
    %s84 = sphi 0, %s86
    %s87 = sphi 0, %s84
    %s88 = sphi 0, %s87
    %s104 = sphi 0, %s88
    %s110 = sphi 0, %s112
    %s113 = sphi 0, %s110
    %s114 = sphi 0, %s113
    %s130 = sphi 0, %s114
    %s138 = sphi 0, %s140
    %s141 = sphi 0, %s138
    %s142 = sphi 0, %s141
    %s158 = sphi 0, %s142
  $region4: #{decoder_with_rnn_forward.3} parent=0 // loop_header_branch
    %13 = sbr.rel (%p11) target = $region8
  $region5: #{decoder_with_rnn_forward.3} parent=0 // loop_body
    %s15 = ssub.s32 %s10, 1
    %s16 = ssub.s32 %s10, 2
    %s23 = sadd.s32 1, %s18
    %p24 = scmp.ge.s32.totalorder %s23, 1
    %s25 = scalar_select %p24, 0, %s23
    %s26 = sadd.s32 1, %s17
    %s27 = scalar_select %p24, %s26, %s17
    %p28 = scmp.ge.s32.totalorder %s27, 2
    %s29 = scalar_select %p28, 0, %s27
    %s30 = ssub.s32 %s17, %s29
    %p31 = scmp.eq.s32.totalorder %s30, 0
    %s33 = sadd.s32 %s32, 1
    %s34 = scalar_select %p31, %s32, %s33
    %p37 = pneg %p31
    %p38 = scmp.eq.s32.totalorder %s10, 1
    %p39 = por %p37, %p38
    %p40 = scmp.ne.s32.totalorder %s32, %s35
    %p41 = scmp.eq.s32.totalorder %s10, 0
    %p42 = por %p40, %p41
    %p43 = scmp.ne.s32.totalorder %s32, %s35
    %p44 = scmp.eq.s32.totalorder %s15, 1
    %p45 = por %p43, %p44
    %p46 = scmp.ne.s32.totalorder %s35, %s36
    %p47 = scmp.eq.s32.totalorder %s15, 0
    %p48 = por %p46, %p47
    %p49 = scmp.ne.s32.totalorder %s35, %s36
    %p50 = scmp.eq.s32.totalorder %s16, 1
    %p51 = por %p49, %p50
    %p53 = scmp.ne.s32.totalorder %s36, %s52
    %p54 = scmp.eq.s32.totalorder %s16, 0
    %p55 = por %p53, %p54
    %s56 = ssub.s32 %s18, %s25
    %p57 = scmp.eq.s32.totalorder %s56, 0
    %s59 = sadd.s32 %s58, 1
    %s60 = scalar_select %p57, %s58, %s59
    %p63 = pneg %p57
    %p64 = scmp.eq.s32.totalorder %s10, 1
    %p65 = por %p63, %p64
    %p66 = scmp.ne.s32.totalorder %s58, %s61
    %p67 = scmp.eq.s32.totalorder %s10, 0
    %p68 = por %p66, %p67
    %p69 = scmp.ne.s32.totalorder %s58, %s61
    %p70 = scmp.eq.s32.totalorder %s15, 1
    %p71 = por %p69, %p70
    %p72 = scmp.ne.s32.totalorder %s61, %s62
    %p73 = scmp.eq.s32.totalorder %s15, 0
    %p74 = por %p72, %p73
    %p75 = scmp.ne.s32.totalorder %s61, %s62
    %p76 = scmp.eq.s32.totalorder %s16, 1
    %p77 = por %p75, %p76
    %p79 = scmp.ne.s32.totalorder %s62, %s78
    %p80 = scmp.eq.s32.totalorder %s16, 0
    %p81 = por %p79, %p80
    %s82 = ssub.s32 %s18, %s25
    %p83 = scmp.eq.s32.totalorder %s82, 0
    %s85 = sadd.s32 %s84, 1
    %s86 = scalar_select %p83, %s84, %s85
    %p89 = pneg %p83
    %p90 = scmp.eq.s32.totalorder %s10, 1
    %p91 = por %p89, %p90
    %p92 = scmp.ne.s32.totalorder %s84, %s87
    %p93 = scmp.eq.s32.totalorder %s10, 0
    %p94 = por %p92, %p93
    %p95 = scmp.ne.s32.totalorder %s84, %s87
    %p96 = scmp.eq.s32.totalorder %s15, 1
    %p97 = por %p95, %p96
    %p98 = scmp.ne.s32.totalorder %s87, %s88
    %p99 = scmp.eq.s32.totalorder %s15, 0
    %p100 = por %p98, %p99
    %p101 = scmp.ne.s32.totalorder %s87, %s88
    %p102 = scmp.eq.s32.totalorder %s16, 1
    %p103 = por %p101, %p102
    %p105 = scmp.ne.s32.totalorder %s88, %s104
    %p106 = scmp.eq.s32.totalorder %s16, 0
    %p107 = por %p105, %p106
    %s108 = ssub.s32 %s17, %s29
    %p109 = scmp.eq.s32.totalorder %s108, 0
    %s111 = sadd.s32 %s110, 1
    %s112 = scalar_select %p109, %s110, %s111
    %p115 = pneg %p109
    %p116 = scmp.eq.s32.totalorder %s10, 1
    %p117 = por %p115, %p116
    %p118 = scmp.ne.s32.totalorder %s110, %s113
    %p119 = scmp.eq.s32.totalorder %s10, 0
    %p120 = por %p118, %p119
    %p121 = scmp.ne.s32.totalorder %s110, %s113
    %p122 = scmp.eq.s32.totalorder %s15, 1
    %p123 = por %p121, %p122
    %p124 = scmp.ne.s32.totalorder %s113, %s114
    %p125 = scmp.eq.s32.totalorder %s15, 0
    %p126 = por %p124, %p125
    %p127 = scmp.ne.s32.totalorder %s113, %s114
    %p128 = scmp.eq.s32.totalorder %s16, 1
    %p129 = por %p127, %p128
    %p131 = scmp.ne.s32.totalorder %s114, %s130
    %p132 = scmp.eq.s32.totalorder %s16, 0
    %p133 = por %p131, %p132
    %s134 = ssub.s32 %s17, %s29
    %s135 = ssub.s32 %s18, %s25
    %s136 = sor.u32 %s134, %s135
    %p137 = scmp.eq.s32.totalorder %s136, 0
    %s139 = sadd.s32 %s138, 1
    %s140 = scalar_select %p137, %s138, %s139
    %p143 = pneg %p137
    %p144 = scmp.eq.s32.totalorder %s10, 1
    %p145 = por %p143, %p144
    %p146 = scmp.ne.s32.totalorder %s138, %s141
    %p147 = scmp.eq.s32.totalorder %s10, 0
    %p148 = por %p146, %p147
    %p149 = scmp.ne.s32.totalorder %s138, %s141
    %p150 = scmp.eq.s32.totalorder %s15, 1
    %p151 = por %p149, %p150
    %p152 = scmp.ne.s32.totalorder %s141, %s142
    %p153 = scmp.eq.s32.totalorder %s15, 0
    %p154 = por %p152, %p153
    %p155 = scmp.ne.s32.totalorder %s141, %s142
    %p156 = scmp.eq.s32.totalorder %s16, 1
    %p157 = por %p155, %p156
    %p159 = scmp.ne.s32.totalorder %s142, %s158
    %p160 = scmp.eq.s32.totalorder %s16, 0
    %p161 = por %p159, %p160
    %p162 = scmp.le.s32.totalorder 1, %s10
    %p163 = scmp.lt.s32.totalorder %s10, 3
    %p164 = pnand %p162, %p163
    %p165 = pneg %p164
    // Predicated region
    $region9: #{decoder_with_rnn_forward.3} parent=5 // pred_check
      _
    $region10: #{decoder_with_rnn_forward.3} parent=5 // pred_check_branch
      %167 = sbr.rel (%p164) target = $region12
    $region11: #{decoder_with_rnn_forward.3} parent=5 // pred_region
      %s168 = ssub.s32 %s10, 1
      // Predicated region
      $region13: #{decoder_with_rnn_forward.3} parent=11 // pred_check
        %p169 = pneg %p74
      $region14: #{decoder_with_rnn_forward.3} parent=11 // pred_check_branch
        %171 = sbr.rel (%p169) target = $region16
      $region15: #{decoder_with_rnn_forward.3} parent=11 // pred_region
        %p172 = scmp.lt.s32.totalorder %s20, 0
        %s173 = scalar_select %p172, %s20, 0
        %s174 = smul.addr %s173, 4
        %s175 = scalar_lea.vmem %s1, %s174
      $region16: #{decoder_with_rnn_forward.3} parent=11 // pred_fallthru
        _
      // Predicated region
      $region17: #{decoder_with_rnn_forward.3} parent=11 // pred_check
        %p176 = pneg %p100
      $region18: #{decoder_with_rnn_forward.3} parent=11 // pred_check_branch
        %178 = sbr.rel (%p176) target = $region20
      $region19: #{decoder_with_rnn_forward.3} parent=11 // pred_region
        %p179 = scmp.lt.s32.totalorder %s20, 0
        %s180 = scalar_select %p179, %s20, 0
        %s181 = scalar_lea.vmem %s2, %s180
      $region20: #{decoder_with_rnn_forward.3} parent=11 // pred_fallthru
        _
    $region12: #{decoder_with_rnn_forward.3} parent=5 // pred_fallthru
      _
    %p182 = scmp.lt.s32.totalorder %s10, 2
    // Predicated region
    $region21: #{decoder_with_rnn_forward.3} parent=5 // pred_check
      %p183 = pneg %p182
    $region22: #{decoder_with_rnn_forward.3} parent=5 // pred_check_branch
      %185 = sbr.rel (%p183) target = $region24
    $region23: #{decoder_with_rnn_forward.3} parent=5 // pred_region
      // Predicated region
      $region25: #{decoder_with_rnn_forward.3} parent=23 // pred_check
        %p186 = pneg %p42
      $region26: #{decoder_with_rnn_forward.3} parent=23 // pred_check_branch
        %188 = sbr.rel (%p186) target = $region28
      $region27: #{decoder_with_rnn_forward.3} parent=23 // pred_region
        %s189 = smul.u32 4, %s17
        %p190 = scmp.lt.s32.totalorder %s189, 7
        %s191 = scalar_select %p190, %s189, 7
        %s192 = smul.addr %s191, 4
        %s193 = scalar_lea.vmem %s0, %s192
        %s194 = smul.u32 4, %s17
      $region28: #{decoder_with_rnn_forward.3} parent=23 // pred_fallthru
        _
      // Predicated region
      $region29: #{decoder_with_rnn_forward.3} parent=23 // pred_check
        %p195 = pneg %p120
      $region30: #{decoder_with_rnn_forward.3} parent=23 // pred_check_branch
        %197 = sbr.rel (%p195) target = $region32
      $region31: #{decoder_with_rnn_forward.3} parent=23 // pred_region
        %s198 = smul.u32 4, %s17
        %p199 = scmp.lt.s32.totalorder %s198, 7
        %s200 = scalar_select %p199, %s198, 7
        %s201 = smul.addr %s200, 8
        %s202 = scalar_lea.vmem %s3, %s201
        %s203 = smul.u32 4, %s17
      $region32: #{decoder_with_rnn_forward.3} parent=23 // pred_fallthru
        _
    $region24: #{decoder_with_rnn_forward.3} parent=5 // pred_fallthru
      _
    %p204 = scmp.le.s32.totalorder 1, %s10
    %p205 = scmp.lt.s32.totalorder %s10, 3
    %p206 = pnand %p204, %p205
    %p207 = pneg %p206
    // Predicated region
    $region33: #{decoder_with_rnn_forward.3} parent=5 // pred_check
      _
    $region34: #{decoder_with_rnn_forward.3} parent=5 // pred_check_branch
      %209 = sbr.rel (%p206) target = $region36
    $region35: #{decoder_with_rnn_forward.3} parent=5 // pred_region
      %s210 = ssub.s32 %s10, 1
      %s211 = smul.u32 4, %s19
      %p212 = scmp.lt.s32.totalorder %s211, 7
      %s213 = scalar_select %p212, %s211, 7
      %s214 = smul.addr %s213, 4
      %s215 = scalar_lea.vmem %s0, %s214
      %p216 = pneg %p48
      %p217 = pneg %p45
      %p218 = scmp.lt.s32.totalorder %s20, 0
      %s219 = scalar_select %p218, %s20, 0
      %s220 = smul.addr %s219, 4
      %s221 = scalar_lea.vmem %s1, %s220
      %p222 = pneg %p74
      %p223 = pneg %p71
      %p224 = scmp.lt.s32.totalorder %s20, 0
      %s225 = scalar_select %p224, %s20, 0
      %s226 = scalar_lea.vmem %s2, %s225
      %p227 = pneg %p100
      %p228 = pneg %p97
      %s229 = smul.u32 4, %s19
      %p230 = scmp.lt.s32.totalorder %s229, 7
      %s231 = scalar_select %p230, %s229, 7
      %s232 = smul.addr %s231, 8
      %s233 = scalar_lea.vmem %s3, %s232
      %p234 = pneg %p126
      %p235 = pneg %p123
      %p236 = pneg %p154
      %p237 = pneg %p151
      %s238 = smul.u32 4, %s19
      %p239 = scmp.lt.s32.totalorder %s238, 7
      %s240 = scalar_select %p239, %s238, 7
      %p241 = scmp.lt.s32.totalorder %s20, 0
      %s242 = scalar_select %p241, %s20, 0
      %s243 = sadd.s32 %s242, %s240
      %s244 = smul.addr %s243, 8
      %s245 = scalar_lea.vmem %s4, %s244
      %s246 = smul.u32 4, %s19
      %p247 = scmp.lt.s32.totalorder %s246, 7
      %s248 = scalar_select %p247, %s246, 7
      %s249 = smul.addr %s248, 4
      %s250 = scalar_lea.vmem %s0, %s249
      %s251 = smul.u32 4, %s19
      %p252 = scmp.lt.s32.totalorder %s20, 0
      %s253 = scalar_select %p252, %s20, 0
      %s254 = smul.addr %s253, 4
      %s255 = scalar_lea.vmem %s1, %s254
      %p256 = scmp.lt.s32.totalorder %s20, 0
      %s257 = scalar_select %p256, %s20, 0
      %s258 = scalar_lea.vmem %s2, %s257
      %s259 = smul.u32 4, %s19
      %p260 = scmp.lt.s32.totalorder %s259, 7
      %s261 = scalar_select %p260, %s259, 7
      %s262 = smul.addr %s261, 8
      %s263 = scalar_lea.vmem %s3, %s262
      %s264 = smul.u32 4, %s19
      %s265 = smul.u32 4, %s19
      %p266 = scmp.lt.s32.totalorder %s265, 7
      %s267 = scalar_select %p266, %s265, 7
      %p268 = scmp.lt.s32.totalorder %s20, 0
      %s269 = scalar_select %p268, %s20, 0
      %s270 = sadd.s32 %s269, %s267
      %s271 = smul.addr %s270, 8
      %s272 = scalar_lea.vmem %s4, %s271
      %s273 = smul.u32 4, %s19
      %v275 = vld [vmem:[%s250] sm:$0xf]
      %v276 = vld [vmem:[%s250 + $0x4] sm:$0xf]
      %v277 = vld [vmem:[%s250 + $0x8] sm:$0xf]
      %v278 = vld [vmem:[%s250 + $0xc] sm:$0xf]
      %v279 = vld [vmem:[%s255] sm:$0xf]
      %v280 = vld [vmem:[%s255 + $0x4] sm:$0xf]
      %v281 = vld [vmem:[%s255 + $0x8] sm:$0xf]
      %v282 = vld [vmem:[%s255 + $0xc] sm:$0xf]
      %v283 = vld [vmem:[%s255 + $0x10] sm:$0xf]
      %v284 = vld [vmem:[%s255 + $0x14] sm:$0xf]
      %v285 = vld [vmem:[%s255 + $0x18] sm:$0xf]
      %v286 = vld [vmem:[%s255 + $0x1c] sm:$0xf]
      %v287 = vld [vmem:[%s255 + $0x20] sm:$0xf]
      %v288 = vld [vmem:[%s255 + $0x24] sm:$0xf]
      %v289 = vld [vmem:[%s255 + $0x28] sm:$0xf]
      %v290 = vld [vmem:[%s255 + $0x2c] sm:$0xf]
      %v291 = vld [vmem:[%s255 + $0x30] sm:$0xf]
      %v292 = vld [vmem:[%s255 + $0x34] sm:$0xf]
      %v293 = vld [vmem:[%s255 + $0x38] sm:$0xf]
      %v294 = vld [vmem:[%s255 + $0x3c] sm:$0xf]
      %v295 = vld [vmem:[%s258] sm:$0x1]
      %v297 = vlaneseq
      %v298 = vshrl.u32 %v297, 7
      %v299 = vsub.s32 0, %v298
      %v300 = vrot.slane %v295, %v299
      %v306 = vunpack.c.l.b16 %v275
      %v307 = vunpack.c.l.b16 %v276
      %v308 = vunpack.c.l.b16 %v277
      %v309 = vunpack.c.l.b16 %v278
      %v310 = vpack.c.b16 %v307, %v306
      %v311 = vpack.c.b16 %v309, %v308
      %v330 = vunpack.c.l.b16 %v279
      %v331 = vunpack.c.l.b16 %v280
      %v332 = vunpack.c.l.b16 %v281
      %v333 = vunpack.c.l.b16 %v282
      %v334 = vunpack.c.l.b16 %v283
      %v335 = vunpack.c.l.b16 %v284
      %v336 = vunpack.c.l.b16 %v285
      %v337 = vunpack.c.l.b16 %v286
      %v338 = vunpack.c.l.b16 %v287
      %v339 = vunpack.c.l.b16 %v288
      %v340 = vunpack.c.l.b16 %v289
      %v341 = vunpack.c.l.b16 %v290
      %v342 = vunpack.c.l.b16 %v291
      %v343 = vunpack.c.l.b16 %v292
      %v344 = vunpack.c.l.b16 %v293
      %v345 = vunpack.c.l.b16 %v294
      %v346 = vpack.c.b16 %v331, %v330
      %v347 = vpack.c.b16 %v333, %v332
      %v348 = vpack.c.b16 %v335, %v334
      %v349 = vpack.c.b16 %v337, %v336
      %v350 = vpack.c.b16 %v339, %v338
      %v351 = vpack.c.b16 %v341, %v340
      %v352 = vpack.c.b16 %v343, %v342
      %v353 = vpack.c.b16 %v345, %v344
      %362 = vmatprep.subr.bf16.mxu0 0
      %363 = vmatpush1.bf16.msra.mxu0 %v346
      %364 = vmatprep.subr.bf16.mxu0 0
      %365 = vmatpush1.bf16.msra.mxu0 %v347
      %366 = vmatprep.subr.bf16.mxu0 0
      %367 = vmatpush1.bf16.msra.mxu0 %v348
      %368 = vmatprep.subr.bf16.mxu0 0
      %369 = vmatpush1.bf16.msra.mxu0 %v349
      %370 = vmatprep.subr.bf16.mxu0 0
      %371 = vmatpush1.bf16.msra.mxu0 %v350
      %372 = vmatprep.subr.bf16.mxu0 0
      %373 = vmatpush1.bf16.msra.mxu0 %v351
      %374 = vmatprep.subr.bf16.mxu0 0
      %375 = vmatpush1.bf16.msra.mxu0 %v352
      %376 = vmatprep.subr.bf16.mxu0 0
      %377 = vmatpush1.bf16.msra.mxu0 %v353
      %378 = vmatprep.subr.bf16.mxu0 0
      %379 = vmatpush1.bf16.msra.mxu0 0
      %380 = vmatprep.subr.bf16.mxu0 0
      %381 = vmatpush1.bf16.msra.mxu0 0
      %382 = vmatprep.subr.bf16.mxu0 0
      %383 = vmatpush1.bf16.msra.mxu0 0
      %384 = vmatprep.subr.bf16.mxu0 0
      %385 = vmatpush1.bf16.msra.mxu0 0
      %386 = vmatprep.subr.bf16.mxu0 0
      %387 = vmatpush1.bf16.msra.mxu0 0
      %388 = vmatprep.subr.bf16.mxu0 0
      %389 = vmatpush1.bf16.msra.mxu0 0
      %390 = vmatprep.subr.bf16.mxu0 0
      %391 = vmatpush1.bf16.msra.mxu0 0
      %392 = vmatprep.subr.bf16.mxu0 0
      %393 = vmatpush1.bf16.msra.mxu0 0
      %394 = vmatprep.mubr.bf16.mxu0 0
      %395 = vmatmul.mubr.bf16.gmra.mrb[0].mxu0 %v310
      %v396 = vpop.f32.mrb[0].mxu0
      %v397 = vadd.f32 %v300, %v396
      %v398 = vpop.f32.mrb[0].mxu0
      %v399 = vpop.f32.mrb[0].mxu0
      %v400 = vadd.f32 %v300, %v399
      %v401 = vpop.f32.mrb[0].mxu0
      %402 = vmatprep.mubr.bf16.mxu0 0
      %403 = vmatmul.mubr.bf16.gmra.mrb[0].mxu0 %v311
      %v404 = vpop.f32.mrb[0].mxu0
      %v405 = vadd.f32 %v300, %v404
      %v406 = vpop.f32.mrb[0].mxu0
      %v407 = vpop.f32.mrb[0].mxu0
      %v408 = vadd.f32 %v300, %v407
      %v409 = vpop.f32.mrb[0].mxu0
      %410 = vdwg.mxu0
      %v411 = vld [vmem:[%s263] sm:$0xff]
      %v412 = vld [vmem:[%s263 + $0x8] sm:$0xff]
      %v413 = vld [vmem:[%s263 + $0x10] sm:$0xff]
      %v414 = vld [vmem:[%s263 + $0x18] sm:$0xff]
      %416 = vset.pattern.permute.xlu0 0
      %417 = vperm.xlu0 %416, %v411
      %v418 = vpop.permute.xlu0 %417
      %421 = vset.pattern.permute.xlu0 0
      %422 = vperm.xlu0 %421, %v412
      %v423 = vpop.permute.xlu0 %422
      %426 = vset.pattern.permute.xlu0 0
      %427 = vperm.xlu0 %426, %v413
      %v428 = vpop.permute.xlu0 %427
      %431 = vset.pattern.permute.xlu0 0
      %432 = vperm.xlu0 %431, %v414
      %v433 = vpop.permute.xlu0 %432
      %v435 = vmul.f32 %v397, %v418
      %v436 = vmul.f32 %v400, %v423
      %v437 = vmul.f32 %v405, %v428
      %v438 = vmul.f32 %v408, %v433
      %439 = vst [vmem:[%s272] sm:$0xff] %v435
      %440 = vst [vmem:[%s272 + $0x8] sm:$0xff] %v436
      %441 = vst [vmem:[%s272 + $0x10] sm:$0xff] %v437
      %442 = vst [vmem:[%s272 + $0x18] sm:$0xff] %v438
      %s443 = smul.u32 4, %s19
      %p444 = scmp.lt.s32.totalorder %s443, 7
      %s445 = scalar_select %p444, %s443, 7
      %p446 = scmp.lt.s32.totalorder %s20, 0
      %s447 = scalar_select %p446, %s20, 0
      %s448 = sadd.s32 %s447, %s445
      %s449 = smul.addr %s448, 8
      %s450 = scalar_lea.vmem %s4, %s449
      // Predicated region
      $region37: #{decoder_with_rnn_forward.3} parent=35 // pred_check
        %p451 = pneg %p151
      $region38: #{decoder_with_rnn_forward.3} parent=35 // pred_check_branch
        %453 = sbr.rel (%p451) target = $region40
      $region39: #{decoder_with_rnn_forward.3} parent=35 // pred_region
        %s454 = smul.u32 4, %s19
      $region40: #{decoder_with_rnn_forward.3} parent=35 // pred_fallthru
        _
    $region36: #{decoder_with_rnn_forward.3} parent=5 // pred_fallthru
      _
    %p455 = scmp.le.s32.totalorder 2, %s10
    // Predicated region
    $region41: #{decoder_with_rnn_forward.3} parent=5 // pred_check
      %p456 = pneg %p455
    $region42: #{decoder_with_rnn_forward.3} parent=5 // pred_check_branch
      %458 = sbr.rel (%p456) target = $region44
    $region43: #{decoder_with_rnn_forward.3} parent=5 // pred_region
      %s459 = ssub.s32 %s10, 2
      // Predicated region
      $region45: #{decoder_with_rnn_forward.3} parent=43 // pred_check
        %p460 = pneg %p157
      $region46: #{decoder_with_rnn_forward.3} parent=43 // pred_check_branch
        %462 = sbr.rel (%p460) target = $region48
      $region47: #{decoder_with_rnn_forward.3} parent=43 // pred_region
        %s463 = smul.u32 4, %s21
        %p464 = scmp.lt.s32.totalorder %s463, 7
        %s465 = scalar_select %p464, %s463, 7
        %p466 = scmp.lt.s32.totalorder %s22, 0
        %s467 = scalar_select %p466, %s22, 0
        %s468 = sadd.s32 %s467, %s465
        %s469 = smul.addr %s468, 8
        %s470 = scalar_lea.vmem %s4, %s469
      $region48: #{decoder_with_rnn_forward.3} parent=43 // pred_fallthru
        _
    $region44: #{decoder_with_rnn_forward.3} parent=5 // pred_fallthru
      _
  $region6: #{decoder_with_rnn_forward.3} parent=0 // loop_footer
    %s14 = sadd.s32 1, %s10
  $region7: #{decoder_with_rnn_forward.3} parent=0 // loop_footer_branch
    %9 = sbr.rel target = $region3
  $region8: #{decoder_with_rnn_forward.3} parent=0 // loop_exit
    _

// kernel: decoder_with_rnn_forward.2
$region0: #{decoder_with_rnn_forward.2}
  #allocation0 [shape = 'u32[]', space=smem, size = 0x4, offset = 0x4, fixed_abs, tag = 'smem constant byte address 0x4 - core index']
  #allocation1 [shape = 'u32[144,128]{1,0:T(1,128)}', space=vmem, size = 0x12000, scoped, tag = 'internal scratch']
  #allocation2 [shape = 'f32[8,128]{1,0:T(8,128)}', space=vmem, size = 0x1000, scoped, tag = 'scratch operand']
  #allocation3 [shape = 'f32[8,128]{1,0:T(8,128)}', space=vmem, size = 0x1000, scoped, tag = 'scratch operand']
  %s0 = inlined_call_operand.vmem [shape: f32[8,128], index: 0, kind: input, shape index: {}]
  %s1 = inlined_call_operand.vmem [shape: f32[8,128], index: 1, kind: input, shape index: {}]
  %s2 = inlined_call_operand.vmem [shape: f32[8,8,512], index: 2, kind: input, shape index: {}]
  %s3 = inlined_call_operand.vmem [shape: bf16[128,512], index: 3, kind: input, shape index: {}]
  %s4 = inlined_call_operand.vmem [shape: f32[8,8,128], index: 4, kind: output, shape index: {}]
  %s5 = sld [smem:[#allocation0]]
  $region53: #{decoder_with_rnn_forward.2} parent=0
    _
  %s7 = ssub.s32 1, %s5
  %s8 = scalar_select 0, %s7, %s5
  loop: start=0, step=1, limit=4
  $region2: #{decoder_with_rnn_forward.2} parent=0 // loop_pre_header
    _
  $region3: #{decoder_with_rnn_forward.2} parent=0 // loop_header
    %s10 = sphi 0, %s14
    %p11 = scmp.ge.s32.totalorder %s10, 4
    %s18 = sphi 0, %s18
    %s20 = sphi 0, %s18
    %s21 = sphi 0, %s20
    %s35 = sphi 0, %s21
    %s39 = sphi 0, %s39
    %s41 = sphi 0, %s39
    %s42 = sphi 0, %s41
    %s56 = sphi 0, %s42
    %s62 = sphi 0, %s64
    %s65 = sphi 0, %s62
    %s66 = sphi 0, %s65
    %s82 = sphi 0, %s66
    %s86 = sphi 0, %s86
    %s88 = sphi 0, %s86
    %s89 = sphi 0, %s88
    %s103 = sphi 0, %s89
    %s109 = sphi 0, %s111
    %s112 = sphi 0, %s109
    %s113 = sphi 0, %s112
    %s129 = sphi 0, %s113
  $region4: #{decoder_with_rnn_forward.2} parent=0 // loop_header_branch
    %13 = sbr.rel (%p11) target = $region8
  $region5: #{decoder_with_rnn_forward.2} parent=0 // loop_body
    %s15 = ssub.s32 %s10, 1
    %s16 = ssub.s32 %s10, 2
    %s17 = sadd.s32 %s10, 1
    %s19 = sadd.s32 %s18, 1
    %p22 = scmp.eq.s32.totalorder %s10, 1
    %p23 = scmp.ne.s32.totalorder %s18, %s20
    %p24 = scmp.eq.s32.totalorder %s10, 0
    %p25 = por %p23, %p24
    %p26 = scmp.ne.s32.totalorder %s18, %s20
    %p27 = scmp.eq.s32.totalorder %s15, 1
    %p28 = por %p26, %p27
    %p29 = scmp.ne.s32.totalorder %s20, %s21
    %p30 = scmp.eq.s32.totalorder %s15, 0
    %p31 = por %p29, %p30
    %p32 = scmp.ne.s32.totalorder %s20, %s21
    %p33 = scmp.eq.s32.totalorder %s16, 1
    %p34 = por %p32, %p33
    %p36 = scmp.ne.s32.totalorder %s21, %s35
    %p37 = scmp.eq.s32.totalorder %s16, 0
    %p38 = por %p36, %p37
    %s40 = sadd.s32 %s39, 1
    %p43 = scmp.eq.s32.totalorder %s10, 1
    %p44 = scmp.ne.s32.totalorder %s39, %s41
    %p45 = scmp.eq.s32.totalorder %s10, 0
    %p46 = por %p44, %p45
    %p47 = scmp.ne.s32.totalorder %s39, %s41
    %p48 = scmp.eq.s32.totalorder %s15, 1
    %p49 = por %p47, %p48
    %p50 = scmp.ne.s32.totalorder %s41, %s42
    %p51 = scmp.eq.s32.totalorder %s15, 0
    %p52 = por %p50, %p51
    %p53 = scmp.ne.s32.totalorder %s41, %s42
    %p54 = scmp.eq.s32.totalorder %s16, 1
    %p55 = por %p53, %p54
    %p57 = scmp.ne.s32.totalorder %s42, %s56
    %p58 = scmp.eq.s32.totalorder %s16, 0
    %p59 = por %p57, %p58
    %s60 = ssub.s32 %s10, %s17
    %p61 = scmp.eq.s32.totalorder %s60, 0
    %s63 = sadd.s32 %s62, 1
    %s64 = scalar_select %p61, %s62, %s63
    %p67 = pneg %p61
    %p68 = scmp.eq.s32.totalorder %s10, 1
    %p69 = por %p67, %p68
    %p70 = scmp.ne.s32.totalorder %s62, %s65
    %p71 = scmp.eq.s32.totalorder %s10, 0
    %p72 = por %p70, %p71
    %p73 = scmp.ne.s32.totalorder %s62, %s65
    %p74 = scmp.eq.s32.totalorder %s15, 1
    %p75 = por %p73, %p74
    %p76 = scmp.ne.s32.totalorder %s65, %s66
    %p77 = scmp.eq.s32.totalorder %s15, 0
    %p78 = por %p76, %p77
    %p79 = scmp.ne.s32.totalorder %s65, %s66
    %p80 = scmp.eq.s32.totalorder %s16, 1
    %p81 = por %p79, %p80
    %p83 = scmp.ne.s32.totalorder %s66, %s82
    %p84 = scmp.eq.s32.totalorder %s16, 0
    %p85 = por %p83, %p84
    %s87 = sadd.s32 %s86, 1
    %p90 = scmp.eq.s32.totalorder %s10, 1
    %p91 = scmp.ne.s32.totalorder %s86, %s88
    %p92 = scmp.eq.s32.totalorder %s10, 0
    %p93 = por %p91, %p92
    %p94 = scmp.ne.s32.totalorder %s86, %s88
    %p95 = scmp.eq.s32.totalorder %s15, 1
    %p96 = por %p94, %p95
    %p97 = scmp.ne.s32.totalorder %s88, %s89
    %p98 = scmp.eq.s32.totalorder %s15, 0
    %p99 = por %p97, %p98
    %p100 = scmp.ne.s32.totalorder %s88, %s89
    %p101 = scmp.eq.s32.totalorder %s16, 1
    %p102 = por %p100, %p101
    %p104 = scmp.ne.s32.totalorder %s89, %s103
    %p105 = scmp.eq.s32.totalorder %s16, 0
    %p106 = por %p104, %p105
    %s107 = ssub.s32 %s10, %s17
    %p108 = scmp.eq.s32.totalorder %s107, 0
    %s110 = sadd.s32 %s109, 1
    %s111 = scalar_select %p108, %s109, %s110
    %p114 = pneg %p108
    %p115 = scmp.eq.s32.totalorder %s10, 1
    %p116 = por %p114, %p115
    %p117 = scmp.ne.s32.totalorder %s109, %s112
    %p118 = scmp.eq.s32.totalorder %s10, 0
    %p119 = por %p117, %p118
    %p120 = scmp.ne.s32.totalorder %s109, %s112
    %p121 = scmp.eq.s32.totalorder %s15, 1
    %p122 = por %p120, %p121
    %p123 = scmp.ne.s32.totalorder %s112, %s113
    %p124 = scmp.eq.s32.totalorder %s15, 0
    %p125 = por %p123, %p124
    %p126 = scmp.ne.s32.totalorder %s112, %s113
    %p127 = scmp.eq.s32.totalorder %s16, 1
    %p128 = por %p126, %p127
    %p130 = scmp.ne.s32.totalorder %s113, %s129
    %p131 = scmp.eq.s32.totalorder %s16, 0
    %p132 = por %p130, %p131
    %p133 = scmp.le.s32.totalorder 1, %s10
    %p134 = scmp.lt.s32.totalorder %s10, 3
    %p135 = pnand %p133, %p134
    %p136 = pneg %p135
    // Predicated region
    $region9: #{decoder_with_rnn_forward.2} parent=5 // pred_check
      _
    $region10: #{decoder_with_rnn_forward.2} parent=5 // pred_check_branch
      %138 = sbr.rel (%p135) target = $region12
    $region11: #{decoder_with_rnn_forward.2} parent=5 // pred_region
      %s139 = ssub.s32 %s10, 1
      // Predicated region
      $region13: #{decoder_with_rnn_forward.2} parent=11 // pred_check
        %p140 = pneg %p31
      $region14: #{decoder_with_rnn_forward.2} parent=11 // pred_check_branch
        %142 = sbr.rel (%p140) target = $region16
      $region15: #{decoder_with_rnn_forward.2} parent=11 // pred_region
        _
      $region16: #{decoder_with_rnn_forward.2} parent=11 // pred_fallthru
        _
      // Predicated region
      $region17: #{decoder_with_rnn_forward.2} parent=11 // pred_check
        %p143 = pneg %p52
      $region18: #{decoder_with_rnn_forward.2} parent=11 // pred_check_branch
        %145 = sbr.rel (%p143) target = $region20
      $region19: #{decoder_with_rnn_forward.2} parent=11 // pred_region
        _
      $region20: #{decoder_with_rnn_forward.2} parent=11 // pred_fallthru
        _
      // Predicated region
      $region21: #{decoder_with_rnn_forward.2} parent=11 // pred_check
        %p146 = pneg %p99
      $region22: #{decoder_with_rnn_forward.2} parent=11 // pred_check_branch
        %148 = sbr.rel (%p146) target = $region24
      $region23: #{decoder_with_rnn_forward.2} parent=11 // pred_region
        _
      $region24: #{decoder_with_rnn_forward.2} parent=11 // pred_fallthru
        _
    $region12: #{decoder_with_rnn_forward.2} parent=5 // pred_fallthru
      _
    %p149 = scmp.lt.s32.totalorder %s10, 2
    // Predicated region
    $region25: #{decoder_with_rnn_forward.2} parent=5 // pred_check
      %p150 = pneg %p149
    $region26: #{decoder_with_rnn_forward.2} parent=5 // pred_check_branch
      %152 = sbr.rel (%p150) target = $region28
    $region27: #{decoder_with_rnn_forward.2} parent=5 // pred_region
      // Predicated region
      $region29: #{decoder_with_rnn_forward.2} parent=27 // pred_check
        %p153 = pneg %p72
      $region30: #{decoder_with_rnn_forward.2} parent=27 // pred_check_branch
        %155 = sbr.rel (%p153) target = $region32
      $region31: #{decoder_with_rnn_forward.2} parent=27 // pred_region
        %s156 = smul.u32 4, %s10
        %p157 = scmp.lt.s32.totalorder %s156, 7
        %s158 = scalar_select %p157, %s156, 7
        %s159 = smul.addr %s158, 4
        %s160 = smul.addr %s159, 8
        %s161 = scalar_lea.vmem %s2, %s160
        %s162 = smul.u32 4, %s10
      $region32: #{decoder_with_rnn_forward.2} parent=27 // pred_fallthru
        _
    $region28: #{decoder_with_rnn_forward.2} parent=5 // pred_fallthru
      _
    %p163 = scmp.le.s32.totalorder 1, %s10
    %p164 = scmp.lt.s32.totalorder %s10, 3
    %p165 = pnand %p163, %p164
    %p166 = pneg %p165
    // Predicated region
    $region33: #{decoder_with_rnn_forward.2} parent=5 // pred_check
      _
    $region34: #{decoder_with_rnn_forward.2} parent=5 // pred_check_branch
      %168 = sbr.rel (%p165) target = $region36
    $region35: #{decoder_with_rnn_forward.2} parent=5 // pred_region
      %s169 = ssub.s32 %s10, 1
      %p170 = pneg %p31
      %p171 = pneg %p28
      %p172 = pneg %p52
      %p173 = pneg %p49
      %s174 = smul.u32 4, %s15
      %p175 = scmp.lt.s32.totalorder %s174, 7
      %s176 = scalar_select %p175, %s174, 7
      %s177 = smul.addr %s176, 4
      %s178 = smul.addr %s177, 8
      %s179 = scalar_lea.vmem %s2, %s178
      %p180 = pneg %p78
      %p181 = pneg %p75
      %p182 = pneg %p99
      %p183 = pneg %p96
      %p184 = pneg %p125
      %p185 = pneg %p122
      %s186 = smul.u32 4, %s15
      %p187 = scmp.lt.s32.totalorder %s186, 7
      %s188 = scalar_select %p187, %s186, 7
      %s189 = smul.addr %s188, 8
      %s190 = scalar_lea.vmem %s4, %s189
      %s191 = smul.u32 4, %s15
      %p192 = scmp.lt.s32.totalorder %s191, 7
      %s193 = scalar_select %p192, %s191, 7
      %s194 = smul.addr %s193, 4
      %s195 = smul.addr %s194, 8
      %s196 = scalar_lea.vmem %s2, %s195
      %s197 = smul.u32 4, %s15
      %s198 = smul.u32 4, %s15
      %p199 = scmp.lt.s32.totalorder %s198, 7
      %s200 = scalar_select %p199, %s198, 7
      %s201 = smul.addr %s200, 8
      %s202 = scalar_lea.vmem %s4, %s201
      %s203 = smul.u32 4, %s15
      %p205 = scmp.eq.s32.totalorder %s15, 0
      // Predicated region
      $region37: #{decoder_with_rnn_forward.2} parent=35 // pred_check
        %p206 = pneg %p205
      $region38: #{decoder_with_rnn_forward.2} parent=35 // pred_check_branch
        %208 = sbr.rel (%p206) target = $region40
      $region39: #{decoder_with_rnn_forward.2} parent=35 // pred_region
        %v209 = vld [vmem:[%s0] sm:$0xff]
        %210 = vst [vmem:[#allocation2] sm:$0xff] %v209
        %v211 = vld [vmem:[%s1] sm:$0xff]
        %212 = vst [vmem:[#allocation3] sm:$0xff] %v211
      $region40: #{decoder_with_rnn_forward.2} parent=35 // pred_fallthru
        _
      %v213 = vld [vmem:[#allocation2] sm:$0xff]
      %v214 = vld [vmem:[#allocation3] sm:$0xff]
      %v215 = vld [vmem:[%s196] sm:$0xff]
      %v216 = vld [vmem:[%s196 + $0x8] sm:$0xff]
      %v217 = vld [vmem:[%s196 + $0x10] sm:$0xff]
      %v218 = vld [vmem:[%s196 + $0x18] sm:$0xff]
      %v219 = vpack.c.bf16 %v213, %v213
      %v220 = vld [vmem:[%s3] sm:$0xff]
      %v221 = vld [vmem:[%s3 + $0x8] sm:$0xff]
      %v222 = vld [vmem:[%s3 + $0x10] sm:$0xff]
      %v223 = vld [vmem:[%s3 + $0x18] sm:$0xff]
      %v224 = vld [vmem:[%s3 + $0x20] sm:$0xff]
      %v225 = vld [vmem:[%s3 + $0x28] sm:$0xff]
      %v226 = vld [vmem:[%s3 + $0x30] sm:$0xff]
      %v227 = vld [vmem:[%s3 + $0x38] sm:$0xff]
      %v228 = vld [vmem:[%s3 + $0x40] sm:$0xff]
      %v229 = vld [vmem:[%s3 + $0x48] sm:$0xff]
      %v230 = vld [vmem:[%s3 + $0x50] sm:$0xff]
      %v231 = vld [vmem:[%s3 + $0x58] sm:$0xff]
      %v232 = vld [vmem:[%s3 + $0x60] sm:$0xff]
      %v233 = vld [vmem:[%s3 + $0x68] sm:$0xff]
      %v234 = vld [vmem:[%s3 + $0x70] sm:$0xff]
      %v235 = vld [vmem:[%s3 + $0x78] sm:$0xff]
      %v236 = vld [vmem:[%s3 + $0x80] sm:$0xff]
      %v237 = vld [vmem:[%s3 + $0x88] sm:$0xff]
      %v238 = vld [vmem:[%s3 + $0x90] sm:$0xff]
      %v239 = vld [vmem:[%s3 + $0x98] sm:$0xff]
      %v240 = vld [vmem:[%s3 + $0xa0] sm:$0xff]
      %v241 = vld [vmem:[%s3 + $0xa8] sm:$0xff]
      %v242 = vld [vmem:[%s3 + $0xb0] sm:$0xff]
      %v243 = vld [vmem:[%s3 + $0xb8] sm:$0xff]
      %v244 = vld [vmem:[%s3 + $0xc0] sm:$0xff]
      %v245 = vld [vmem:[%s3 + $0xc8] sm:$0xff]
      %v246 = vld [vmem:[%s3 + $0xd0] sm:$0xff]
      %v247 = vld [vmem:[%s3 + $0xd8] sm:$0xff]
      %v248 = vld [vmem:[%s3 + $0xe0] sm:$0xff]
      %v249 = vld [vmem:[%s3 + $0xe8] sm:$0xff]
      %v250 = vld [vmem:[%s3 + $0xf0] sm:$0xff]
      %v251 = vld [vmem:[%s3 + $0xf8] sm:$0xff]
      %v284 = vunpack.c.l.b16 %v220
      %v285 = vunpack.c.h.b16 %v220
      %v286 = vunpack.c.l.b16 %v221
      %v287 = vunpack.c.h.b16 %v221
      %v288 = vunpack.c.l.b16 %v222
      %v289 = vunpack.c.h.b16 %v222
      %v290 = vunpack.c.l.b16 %v223
      %v291 = vunpack.c.h.b16 %v223
      %v292 = vunpack.c.l.b16 %v224
      %v293 = vunpack.c.h.b16 %v224
      %v294 = vunpack.c.l.b16 %v225
      %v295 = vunpack.c.h.b16 %v225
      %v296 = vunpack.c.l.b16 %v226
      %v297 = vunpack.c.h.b16 %v226
      %v298 = vunpack.c.l.b16 %v227
      %v299 = vunpack.c.h.b16 %v227
      %v300 = vunpack.c.l.b16 %v228
      %v301 = vunpack.c.h.b16 %v228
      %v302 = vunpack.c.l.b16 %v229
      %v303 = vunpack.c.h.b16 %v229
      %v304 = vunpack.c.l.b16 %v230
      %v305 = vunpack.c.h.b16 %v230
      %v306 = vunpack.c.l.b16 %v231
      %v307 = vunpack.c.h.b16 %v231
      %v308 = vunpack.c.l.b16 %v232
      %v309 = vunpack.c.h.b16 %v232
      %v310 = vunpack.c.l.b16 %v233
      %v311 = vunpack.c.h.b16 %v233
      %v312 = vunpack.c.l.b16 %v234
      %v313 = vunpack.c.h.b16 %v234
      %v314 = vunpack.c.l.b16 %v235
      %v315 = vunpack.c.h.b16 %v235
      %v316 = vunpack.c.l.b16 %v236
      %v317 = vunpack.c.h.b16 %v236
      %v318 = vunpack.c.l.b16 %v237
      %v319 = vunpack.c.h.b16 %v237
      %v320 = vunpack.c.l.b16 %v238
      %v321 = vunpack.c.h.b16 %v238
      %v322 = vunpack.c.l.b16 %v239
      %v323 = vunpack.c.h.b16 %v239
      %v324 = vunpack.c.l.b16 %v240
      %v325 = vunpack.c.h.b16 %v240
      %v326 = vunpack.c.l.b16 %v241
      %v327 = vunpack.c.h.b16 %v241
      %v328 = vunpack.c.l.b16 %v242
      %v329 = vunpack.c.h.b16 %v242
      %v330 = vunpack.c.l.b16 %v243
      %v331 = vunpack.c.h.b16 %v243
      %v332 = vunpack.c.l.b16 %v244
      %v333 = vunpack.c.h.b16 %v244
      %v334 = vunpack.c.l.b16 %v245
      %v335 = vunpack.c.h.b16 %v245
      %v336 = vunpack.c.l.b16 %v246
      %v337 = vunpack.c.h.b16 %v246
      %v338 = vunpack.c.l.b16 %v247
      %v339 = vunpack.c.h.b16 %v247
      %v340 = vunpack.c.l.b16 %v248
      %v341 = vunpack.c.h.b16 %v248
      %v342 = vunpack.c.l.b16 %v249
      %v343 = vunpack.c.h.b16 %v249
      %v344 = vunpack.c.l.b16 %v250
      %v345 = vunpack.c.h.b16 %v250
      %v346 = vunpack.c.l.b16 %v251
      %v347 = vunpack.c.h.b16 %v251
      %v348 = vpack.c.b16 %v288, %v284
      %v349 = vpack.c.b16 %v289, %v285
      %v350 = vpack.c.b16 %v290, %v286
      %v351 = vpack.c.b16 %v291, %v287
      %v352 = vpack.c.b16 %v296, %v292
      %v353 = vpack.c.b16 %v297, %v293
      %v354 = vpack.c.b16 %v298, %v294
      %v355 = vpack.c.b16 %v299, %v295
      %v356 = vpack.c.b16 %v304, %v300
      %v357 = vpack.c.b16 %v305, %v301
      %v358 = vpack.c.b16 %v306, %v302
      %v359 = vpack.c.b16 %v307, %v303
      %v360 = vpack.c.b16 %v312, %v308
      %v361 = vpack.c.b16 %v313, %v309
      %v362 = vpack.c.b16 %v314, %v310
      %v363 = vpack.c.b16 %v315, %v311
      %v364 = vpack.c.b16 %v320, %v316
      %v365 = vpack.c.b16 %v321, %v317
      %v366 = vpack.c.b16 %v322, %v318
      %v367 = vpack.c.b16 %v323, %v319
      %v368 = vpack.c.b16 %v328, %v324
      %v369 = vpack.c.b16 %v329, %v325
      %v370 = vpack.c.b16 %v330, %v326
      %v371 = vpack.c.b16 %v331, %v327
      %v372 = vpack.c.b16 %v336, %v332
      %v373 = vpack.c.b16 %v337, %v333
      %v374 = vpack.c.b16 %v338, %v334
      %v375 = vpack.c.b16 %v339, %v335
      %v376 = vpack.c.b16 %v344, %v340
      %v377 = vpack.c.b16 %v345, %v341
      %v378 = vpack.c.b16 %v346, %v342
      %v379 = vpack.c.b16 %v347, %v343
      %412 = vmatprep.subr.bf16.mxu0 %v349
      %413 = vmatpush1.bf16.msra.mxu0 %v348
      %414 = vmatprep.subr.bf16.mxu0 %v353
      %415 = vmatpush1.bf16.msra.mxu0 %v352
      %416 = vmatprep.subr.bf16.mxu0 %v357
      %417 = vmatpush1.bf16.msra.mxu0 %v356
      %418 = vmatprep.subr.bf16.mxu0 %v361
      %419 = vmatpush1.bf16.msra.mxu0 %v360
      %420 = vmatprep.subr.bf16.mxu0 %v365
      %421 = vmatpush1.bf16.msra.mxu0 %v364
      %422 = vmatprep.subr.bf16.mxu0 %v369
      %423 = vmatpush1.bf16.msra.mxu0 %v368
      %424 = vmatprep.subr.bf16.mxu0 %v373
      %425 = vmatpush1.bf16.msra.mxu0 %v372
      %426 = vmatprep.subr.bf16.mxu0 %v377
      %427 = vmatpush1.bf16.msra.mxu0 %v376
      %428 = vmatprep.subr.bf16.mxu0 0
      %429 = vmatpush1.bf16.msra.mxu0 0
      %430 = vmatprep.subr.bf16.mxu0 0
      %431 = vmatpush1.bf16.msra.mxu0 0
      %432 = vmatprep.subr.bf16.mxu0 0
      %433 = vmatpush1.bf16.msra.mxu0 0
      %434 = vmatprep.subr.bf16.mxu0 0
      %435 = vmatpush1.bf16.msra.mxu0 0
      %436 = vmatprep.subr.bf16.mxu0 0
      %437 = vmatpush1.bf16.msra.mxu0 0
      %438 = vmatprep.subr.bf16.mxu0 0
      %439 = vmatpush1.bf16.msra.mxu0 0
      %440 = vmatprep.subr.bf16.mxu0 0
      %441 = vmatpush1.bf16.msra.mxu0 0
      %442 = vmatprep.subr.bf16.mxu0 0
      %443 = vmatpush1.bf16.msra.mxu0 0
      %444 = vmatprep.mubr.bf16.mxu0 0
      %445 = vmatmul.mubr.bf16.gmra.mrb[0].mxu0 %v219
      %v446 = vpop.f32.mrb[0].mxu0
      %v447 = vadd.f32 0.0, %v446
      %v448 = vpop.f32.mrb[0].mxu0
      %v449 = vadd.f32 0.0, %v448
      %v450 = vpop.f32.mrb[0].mxu0
      %v451 = vpop.f32.mrb[0].mxu0
      %452 = vdwg.mxu0
      %453 = vmatprep.subr.bf16.mxu0 %v351
      %454 = vmatpush1.bf16.msra.mxu0 %v350
      %455 = vmatprep.subr.bf16.mxu0 %v355
      %456 = vmatpush1.bf16.msra.mxu0 %v354
      %457 = vmatprep.subr.bf16.mxu0 %v359
      %458 = vmatpush1.bf16.msra.mxu0 %v358
      %459 = vmatprep.subr.bf16.mxu0 %v363
      %460 = vmatpush1.bf16.msra.mxu0 %v362
      %461 = vmatprep.subr.bf16.mxu0 %v367
      %462 = vmatpush1.bf16.msra.mxu0 %v366
      %463 = vmatprep.subr.bf16.mxu0 %v371
      %464 = vmatpush1.bf16.msra.mxu0 %v370
      %465 = vmatprep.subr.bf16.mxu0 %v375
      %466 = vmatpush1.bf16.msra.mxu0 %v374
      %467 = vmatprep.subr.bf16.mxu0 %v379
      %468 = vmatpush1.bf16.msra.mxu0 %v378
      %469 = vmatprep.subr.bf16.mxu0 0
      %470 = vmatpush1.bf16.msra.mxu0 0
      %471 = vmatprep.subr.bf16.mxu0 0
      %472 = vmatpush1.bf16.msra.mxu0 0
      %473 = vmatprep.subr.bf16.mxu0 0
      %474 = vmatpush1.bf16.msra.mxu0 0
      %475 = vmatprep.subr.bf16.mxu0 0
      %476 = vmatpush1.bf16.msra.mxu0 0
      %477 = vmatprep.subr.bf16.mxu0 0
      %478 = vmatpush1.bf16.msra.mxu0 0
      %479 = vmatprep.subr.bf16.mxu0 0
      %480 = vmatpush1.bf16.msra.mxu0 0
      %481 = vmatprep.subr.bf16.mxu0 0
      %482 = vmatpush1.bf16.msra.mxu0 0
      %483 = vmatprep.subr.bf16.mxu0 0
      %484 = vmatpush1.bf16.msra.mxu0 0
      %485 = vmatprep.mubr.bf16.mxu0 0
      %486 = vmatmul.mubr.bf16.gmra.mrb[0].mxu0 %v219
      %v487 = vpop.f32.mrb[0].mxu0
      %v488 = vadd.f32 0.0, %v487
      %v489 = vpop.f32.mrb[0].mxu0
      %v490 = vadd.f32 0.0, %v489
      %v491 = vpop.f32.mrb[0].mxu0
      %v492 = vpop.f32.mrb[0].mxu0
      %493 = vdwg.mxu0
      %v494 = vadd.f32 %v215, %v447
      %v495 = vadd.f32 %v216, %v449
      %v496 = vadd.f32 %v217, %v488
      %v497 = vadd.f32 %v218, %v490
      %v498 = vxor.u32 %v494, 2147483648
      %v499 = vmul.f32 %v498, 1.442695
      %v500 = vpow.pop %v499
      %v501 = vadd.f32 %v500, 1.0
      %v502 = vrcp.pop %v501
      %v503 = vmul.f32 1.0, %v502
      %v504 = vxor.u32 %v495, 2147483648
      %v505 = vmul.f32 %v504, 1.442695
      %v506 = vpow.pop %v505
      %v507 = vadd.f32 %v506, 1.0
      %v508 = vrcp.pop %v507
      %v509 = vmul.f32 1.0, %v508
      %v510 = vtanh.pop %v496
      %v511 = vxor.u32 %v497, 2147483648
      %v512 = vmul.f32 %v511, 1.442695
      %v513 = vpow.pop %v512
      %v514 = vadd.f32 %v513, 1.0
      %v515 = vrcp.pop %v514
      %v516 = vmul.f32 1.0, %v515
      %v517 = vmul.f32 %v509, %v214
      %v518 = vmul.f32 %v503, %v510
      %v519 = vadd.f32 %v517, %v518
      %v520 = vtanh.pop %v519
      %v521 = vmul.f32 %v516, %v520
      %522 = vst [vmem:[%s202] sm:$0xff] %v521
      %s523 = scalar_lea.vmem %s196, 32
      %v524 = vld [vmem:[%s523] sm:$0xff]
      %v525 = vld [vmem:[%s523 + $0x8] sm:$0xff]
      %v526 = vld [vmem:[%s523 + $0x10] sm:$0xff]
      %v527 = vld [vmem:[%s523 + $0x18] sm:$0xff]
      %v528 = vpack.c.bf16 %v521, %v521
      %v529 = vld [vmem:[%s3] sm:$0xff]
      %v530 = vld [vmem:[%s3 + $0x8] sm:$0xff]
      %v531 = vld [vmem:[%s3 + $0x10] sm:$0xff]
      %v532 = vld [vmem:[%s3 + $0x18] sm:$0xff]
      %v533 = vld [vmem:[%s3 + $0x20] sm:$0xff]
      %v534 = vld [vmem:[%s3 + $0x28] sm:$0xff]
      %v535 = vld [vmem:[%s3 + $0x30] sm:$0xff]
      %v536 = vld [vmem:[%s3 + $0x38] sm:$0xff]
      %v537 = vld [vmem:[%s3 + $0x40] sm:$0xff]
      %v538 = vld [vmem:[%s3 + $0x48] sm:$0xff]
      %v539 = vld [vmem:[%s3 + $0x50] sm:$0xff]
      %v540 = vld [vmem:[%s3 + $0x58] sm:$0xff]
      %v541 = vld [vmem:[%s3 + $0x60] sm:$0xff]
      %v542 = vld [vmem:[%s3 + $0x68] sm:$0xff]
      %v543 = vld [vmem:[%s3 + $0x70] sm:$0xff]
      %v544 = vld [vmem:[%s3 + $0x78] sm:$0xff]
      %v545 = vld [vmem:[%s3 + $0x80] sm:$0xff]
      %v546 = vld [vmem:[%s3 + $0x88] sm:$0xff]
      %v547 = vld [vmem:[%s3 + $0x90] sm:$0xff]
      %v548 = vld [vmem:[%s3 + $0x98] sm:$0xff]
      %v549 = vld [vmem:[%s3 + $0xa0] sm:$0xff]
      %v550 = vld [vmem:[%s3 + $0xa8] sm:$0xff]
      %v551 = vld [vmem:[%s3 + $0xb0] sm:$0xff]
      %v552 = vld [vmem:[%s3 + $0xb8] sm:$0xff]
      %v553 = vld [vmem:[%s3 + $0xc0] sm:$0xff]
      %v554 = vld [vmem:[%s3 + $0xc8] sm:$0xff]
      %v555 = vld [vmem:[%s3 + $0xd0] sm:$0xff]
      %v556 = vld [vmem:[%s3 + $0xd8] sm:$0xff]
      %v557 = vld [vmem:[%s3 + $0xe0] sm:$0xff]
      %v558 = vld [vmem:[%s3 + $0xe8] sm:$0xff]
      %v559 = vld [vmem:[%s3 + $0xf0] sm:$0xff]
      %v560 = vld [vmem:[%s3 + $0xf8] sm:$0xff]
      %v593 = vunpack.c.l.b16 %v529
      %v594 = vunpack.c.h.b16 %v529
      %v595 = vunpack.c.l.b16 %v530
      %v596 = vunpack.c.h.b16 %v530
      %v597 = vunpack.c.l.b16 %v531
      %v598 = vunpack.c.h.b16 %v531
      %v599 = vunpack.c.l.b16 %v532
      %v600 = vunpack.c.h.b16 %v532
      %v601 = vunpack.c.l.b16 %v533
      %v602 = vunpack.c.h.b16 %v533
      %v603 = vunpack.c.l.b16 %v534
      %v604 = vunpack.c.h.b16 %v534
      %v605 = vunpack.c.l.b16 %v535
      %v606 = vunpack.c.h.b16 %v535
      %v607 = vunpack.c.l.b16 %v536
      %v608 = vunpack.c.h.b16 %v536
      %v609 = vunpack.c.l.b16 %v537
      %v610 = vunpack.c.h.b16 %v537
      %v611 = vunpack.c.l.b16 %v538
      %v612 = vunpack.c.h.b16 %v538
      %v613 = vunpack.c.l.b16 %v539
      %v614 = vunpack.c.h.b16 %v539
      %v615 = vunpack.c.l.b16 %v540
      %v616 = vunpack.c.h.b16 %v540
      %v617 = vunpack.c.l.b16 %v541
      %v618 = vunpack.c.h.b16 %v541
      %v619 = vunpack.c.l.b16 %v542
      %v620 = vunpack.c.h.b16 %v542
      %v621 = vunpack.c.l.b16 %v543
      %v622 = vunpack.c.h.b16 %v543
      %v623 = vunpack.c.l.b16 %v544
      %v624 = vunpack.c.h.b16 %v544
      %v625 = vunpack.c.l.b16 %v545
      %v626 = vunpack.c.h.b16 %v545
      %v627 = vunpack.c.l.b16 %v546
      %v628 = vunpack.c.h.b16 %v546
      %v629 = vunpack.c.l.b16 %v547
      %v630 = vunpack.c.h.b16 %v547
      %v631 = vunpack.c.l.b16 %v548
      %v632 = vunpack.c.h.b16 %v548
      %v633 = vunpack.c.l.b16 %v549
      %v634 = vunpack.c.h.b16 %v549
      %v635 = vunpack.c.l.b16 %v550
      %v636 = vunpack.c.h.b16 %v550
      %v637 = vunpack.c.l.b16 %v551
      %v638 = vunpack.c.h.b16 %v551
      %v639 = vunpack.c.l.b16 %v552
      %v640 = vunpack.c.h.b16 %v552
      %v641 = vunpack.c.l.b16 %v553
      %v642 = vunpack.c.h.b16 %v553
      %v643 = vunpack.c.l.b16 %v554
      %v644 = vunpack.c.h.b16 %v554
      %v645 = vunpack.c.l.b16 %v555
      %v646 = vunpack.c.h.b16 %v555
      %v647 = vunpack.c.l.b16 %v556
      %v648 = vunpack.c.h.b16 %v556
      %v649 = vunpack.c.l.b16 %v557
      %v650 = vunpack.c.h.b16 %v557
      %v651 = vunpack.c.l.b16 %v558
      %v652 = vunpack.c.h.b16 %v558
      %v653 = vunpack.c.l.b16 %v559
      %v654 = vunpack.c.h.b16 %v559
      %v655 = vunpack.c.l.b16 %v560
      %v656 = vunpack.c.h.b16 %v560
      %v657 = vpack.c.b16 %v597, %v593
      %v658 = vpack.c.b16 %v598, %v594
      %v659 = vpack.c.b16 %v599, %v595
      %v660 = vpack.c.b16 %v600, %v596
      %v661 = vpack.c.b16 %v605, %v601
      %v662 = vpack.c.b16 %v606, %v602
      %v663 = vpack.c.b16 %v607, %v603
      %v664 = vpack.c.b16 %v608, %v604
      %v665 = vpack.c.b16 %v613, %v609
      %v666 = vpack.c.b16 %v614, %v610
      %v667 = vpack.c.b16 %v615, %v611
      %v668 = vpack.c.b16 %v616, %v612
      %v669 = vpack.c.b16 %v621, %v617
      %v670 = vpack.c.b16 %v622, %v618
      %v671 = vpack.c.b16 %v623, %v619
      %v672 = vpack.c.b16 %v624, %v620
      %v673 = vpack.c.b16 %v629, %v625
      %v674 = vpack.c.b16 %v630, %v626
      %v675 = vpack.c.b16 %v631, %v627
      %v676 = vpack.c.b16 %v632, %v628
      %v677 = vpack.c.b16 %v637, %v633
      %v678 = vpack.c.b16 %v638, %v634
      %v679 = vpack.c.b16 %v639, %v635
      %v680 = vpack.c.b16 %v640, %v636
      %v681 = vpack.c.b16 %v645, %v641
      %v682 = vpack.c.b16 %v646, %v642
      %v683 = vpack.c.b16 %v647, %v643
      %v684 = vpack.c.b16 %v648, %v644
      %v685 = vpack.c.b16 %v653, %v649
      %v686 = vpack.c.b16 %v654, %v650
      %v687 = vpack.c.b16 %v655, %v651
      %v688 = vpack.c.b16 %v656, %v652
      %721 = vmatprep.subr.bf16.mxu0 %v658
      %722 = vmatpush1.bf16.msra.mxu0 %v657
      %723 = vmatprep.subr.bf16.mxu0 %v662
      %724 = vmatpush1.bf16.msra.mxu0 %v661
      %725 = vmatprep.subr.bf16.mxu0 %v666
      %726 = vmatpush1.bf16.msra.mxu0 %v665
      %727 = vmatprep.subr.bf16.mxu0 %v670
      %728 = vmatpush1.bf16.msra.mxu0 %v669
      %729 = vmatprep.subr.bf16.mxu0 %v674
      %730 = vmatpush1.bf16.msra.mxu0 %v673
      %731 = vmatprep.subr.bf16.mxu0 %v678
      %732 = vmatpush1.bf16.msra.mxu0 %v677
      %733 = vmatprep.subr.bf16.mxu0 %v682
      %734 = vmatpush1.bf16.msra.mxu0 %v681
      %735 = vmatprep.subr.bf16.mxu0 %v686
      %736 = vmatpush1.bf16.msra.mxu0 %v685
      %737 = vmatprep.subr.bf16.mxu0 0
      %738 = vmatpush1.bf16.msra.mxu0 0
      %739 = vmatprep.subr.bf16.mxu0 0
      %740 = vmatpush1.bf16.msra.mxu0 0
      %741 = vmatprep.subr.bf16.mxu0 0
      %742 = vmatpush1.bf16.msra.mxu0 0
      %743 = vmatprep.subr.bf16.mxu0 0
      %744 = vmatpush1.bf16.msra.mxu0 0
      %745 = vmatprep.subr.bf16.mxu0 0
      %746 = vmatpush1.bf16.msra.mxu0 0
      %747 = vmatprep.subr.bf16.mxu0 0
      %748 = vmatpush1.bf16.msra.mxu0 0
      %749 = vmatprep.subr.bf16.mxu0 0
      %750 = vmatpush1.bf16.msra.mxu0 0
      %751 = vmatprep.subr.bf16.mxu0 0
      %752 = vmatpush1.bf16.msra.mxu0 0
      %753 = vmatprep.mubr.bf16.mxu0 0
      %754 = vmatmul.mubr.bf16.gmra.mrb[0].mxu0 %v528
      %v755 = vpop.f32.mrb[0].mxu0
      %v756 = vadd.f32 0.0, %v755
      %v757 = vpop.f32.mrb[0].mxu0
      %v758 = vadd.f32 0.0, %v757
      %v759 = vpop.f32.mrb[0].mxu0
      %v760 = vpop.f32.mrb[0].mxu0
      %761 = vdwg.mxu0
      %762 = vmatprep.subr.bf16.mxu0 %v660
      %763 = vmatpush1.bf16.msra.mxu0 %v659
      %764 = vmatprep.subr.bf16.mxu0 %v664
      %765 = vmatpush1.bf16.msra.mxu0 %v663
      %766 = vmatprep.subr.bf16.mxu0 %v668
      %767 = vmatpush1.bf16.msra.mxu0 %v667
      %768 = vmatprep.subr.bf16.mxu0 %v672
      %769 = vmatpush1.bf16.msra.mxu0 %v671
      %770 = vmatprep.subr.bf16.mxu0 %v676
      %771 = vmatpush1.bf16.msra.mxu0 %v675
      %772 = vmatprep.subr.bf16.mxu0 %v680
      %773 = vmatpush1.bf16.msra.mxu0 %v679
      %774 = vmatprep.subr.bf16.mxu0 %v684
      %775 = vmatpush1.bf16.msra.mxu0 %v683
      %776 = vmatprep.subr.bf16.mxu0 %v688
      %777 = vmatpush1.bf16.msra.mxu0 %v687
      %778 = vmatprep.subr.bf16.mxu0 0
      %779 = vmatpush1.bf16.msra.mxu0 0
      %780 = vmatprep.subr.bf16.mxu0 0
      %781 = vmatpush1.bf16.msra.mxu0 0
      %782 = vmatprep.subr.bf16.mxu0 0
      %783 = vmatpush1.bf16.msra.mxu0 0
      %784 = vmatprep.subr.bf16.mxu0 0
      %785 = vmatpush1.bf16.msra.mxu0 0
      %786 = vmatprep.subr.bf16.mxu0 0
      %787 = vmatpush1.bf16.msra.mxu0 0
      %788 = vmatprep.subr.bf16.mxu0 0
      %789 = vmatpush1.bf16.msra.mxu0 0
      %790 = vmatprep.subr.bf16.mxu0 0
      %791 = vmatpush1.bf16.msra.mxu0 0
      %792 = vmatprep.subr.bf16.mxu0 0
      %793 = vmatpush1.bf16.msra.mxu0 0
      %794 = vmatprep.mubr.bf16.mxu0 0
      %795 = vmatmul.mubr.bf16.gmra.mrb[0].mxu0 %v528
      %v796 = vpop.f32.mrb[0].mxu0
      %v797 = vadd.f32 0.0, %v796
      %v798 = vpop.f32.mrb[0].mxu0
      %v799 = vadd.f32 0.0, %v798
      %v800 = vpop.f32.mrb[0].mxu0
      %v801 = vpop.f32.mrb[0].mxu0
      %802 = vdwg.mxu0
      %v803 = vadd.f32 %v524, %v756
      %v804 = vadd.f32 %v525, %v758
      %v805 = vadd.f32 %v526, %v797
      %v806 = vadd.f32 %v527, %v799
      %v807 = vxor.u32 %v803, 2147483648
      %v808 = vmul.f32 %v807, 1.442695
      %v809 = vpow.pop %v808
      %v810 = vadd.f32 %v809, 1.0
      %v811 = vrcp.pop %v810
      %v812 = vmul.f32 1.0, %v811
      %v813 = vxor.u32 %v804, 2147483648
      %v814 = vmul.f32 %v813, 1.442695
      %v815 = vpow.pop %v814
      %v816 = vadd.f32 %v815, 1.0
      %v817 = vrcp.pop %v816
      %v818 = vmul.f32 1.0, %v817
      %v819 = vtanh.pop %v805
      %v820 = vxor.u32 %v806, 2147483648
      %v821 = vmul.f32 %v820, 1.442695
      %v822 = vpow.pop %v821
      %v823 = vadd.f32 %v822, 1.0
      %v824 = vrcp.pop %v823
      %v825 = vmul.f32 1.0, %v824
      %v826 = vmul.f32 %v818, %v519
      %v827 = vmul.f32 %v812, %v819
      %v828 = vadd.f32 %v826, %v827
      %v829 = vtanh.pop %v828
      %v830 = vmul.f32 %v825, %v829
      %s831 = scalar_lea.vmem %s202, 8
      %832 = vst [vmem:[%s831] sm:$0xff] %v830
      %s833 = scalar_lea.vmem %s196, 64
      %v834 = vld [vmem:[%s833] sm:$0xff]
      %v835 = vld [vmem:[%s833 + $0x8] sm:$0xff]
      %v836 = vld [vmem:[%s833 + $0x10] sm:$0xff]
      %v837 = vld [vmem:[%s833 + $0x18] sm:$0xff]
      %v838 = vpack.c.bf16 %v830, %v830
      %v839 = vld [vmem:[%s3] sm:$0xff]
      %v840 = vld [vmem:[%s3 + $0x8] sm:$0xff]
      %v841 = vld [vmem:[%s3 + $0x10] sm:$0xff]
      %v842 = vld [vmem:[%s3 + $0x18] sm:$0xff]
      %v843 = vld [vmem:[%s3 + $0x20] sm:$0xff]
      %v844 = vld [vmem:[%s3 + $0x28] sm:$0xff]
      %v845 = vld [vmem:[%s3 + $0x30] sm:$0xff]
      %v846 = vld [vmem:[%s3 + $0x38] sm:$0xff]
      %v847 = vld [vmem:[%s3 + $0x40] sm:$0xff]
      %v848 = vld [vmem:[%s3 + $0x48] sm:$0xff]
      %v849 = vld [vmem:[%s3 + $0x50] sm:$0xff]
      %v850 = vld [vmem:[%s3 + $0x58] sm:$0xff]
      %v851 = vld [vmem:[%s3 + $0x60] sm:$0xff]
      %v852 = vld [vmem:[%s3 + $0x68] sm:$0xff]
      %v853 = vld [vmem:[%s3 + $0x70] sm:$0xff]
      %v854 = vld [vmem:[%s3 + $0x78] sm:$0xff]
      %v855 = vld [vmem:[%s3 + $0x80] sm:$0xff]
      %v856 = vld [vmem:[%s3 + $0x88] sm:$0xff]
      %v857 = vld [vmem:[%s3 + $0x90] sm:$0xff]
      %v858 = vld [vmem:[%s3 + $0x98] sm:$0xff]
      %v859 = vld [vmem:[%s3 + $0xa0] sm:$0xff]
      %v860 = vld [vmem:[%s3 + $0xa8] sm:$0xff]
      %v861 = vld [vmem:[%s3 + $0xb0] sm:$0xff]
      %v862 = vld [vmem:[%s3 + $0xb8] sm:$0xff]
      %v863 = vld [vmem:[%s3 + $0xc0] sm:$0xff]
      %v864 = vld [vmem:[%s3 + $0xc8] sm:$0xff]
      %v865 = vld [vmem:[%s3 + $0xd0] sm:$0xff]
      %v866 = vld [vmem:[%s3 + $0xd8] sm:$0xff]
      %v867 = vld [vmem:[%s3 + $0xe0] sm:$0xff]
      %v868 = vld [vmem:[%s3 + $0xe8] sm:$0xff]
      %v869 = vld [vmem:[%s3 + $0xf0] sm:$0xff]
      %v870 = vld [vmem:[%s3 + $0xf8] sm:$0xff]
      %v903 = vunpack.c.l.b16 %v839
      %v904 = vunpack.c.h.b16 %v839
      %v905 = vunpack.c.l.b16 %v840
      %v906 = vunpack.c.h.b16 %v840
      %v907 = vunpack.c.l.b16 %v841
      %v908 = vunpack.c.h.b16 %v841
      %v909 = vunpack.c.l.b16 %v842
      %v910 = vunpack.c.h.b16 %v842
      %v911 = vunpack.c.l.b16 %v843
      %v912 = vunpack.c.h.b16 %v843
      %v913 = vunpack.c.l.b16 %v844
      %v914 = vunpack.c.h.b16 %v844
      %v915 = vunpack.c.l.b16 %v845
      %v916 = vunpack.c.h.b16 %v845
      %v917 = vunpack.c.l.b16 %v846
      %v918 = vunpack.c.h.b16 %v846
      %v919 = vunpack.c.l.b16 %v847
      %v920 = vunpack.c.h.b16 %v847
      %v921 = vunpack.c.l.b16 %v848
      %v922 = vunpack.c.h.b16 %v848
      %v923 = vunpack.c.l.b16 %v849
      %v924 = vunpack.c.h.b16 %v849
      %v925 = vunpack.c.l.b16 %v850
      %v926 = vunpack.c.h.b16 %v850
      %v927 = vunpack.c.l.b16 %v851
      %v928 = vunpack.c.h.b16 %v851
      %v929 = vunpack.c.l.b16 %v852
      %v930 = vunpack.c.h.b16 %v852
      %v931 = vunpack.c.l.b16 %v853
      %v932 = vunpack.c.h.b16 %v853
      %v933 = vunpack.c.l.b16 %v854
      %v934 = vunpack.c.h.b16 %v854
      %v935 = vunpack.c.l.b16 %v855
      %v936 = vunpack.c.h.b16 %v855
      %v937 = vunpack.c.l.b16 %v856
      %v938 = vunpack.c.h.b16 %v856
      %v939 = vunpack.c.l.b16 %v857
      %v940 = vunpack.c.h.b16 %v857
      %v941 = vunpack.c.l.b16 %v858
      %v942 = vunpack.c.h.b16 %v858
      %v943 = vunpack.c.l.b16 %v859
      %v944 = vunpack.c.h.b16 %v859
      %v945 = vunpack.c.l.b16 %v860
      %v946 = vunpack.c.h.b16 %v860
      %v947 = vunpack.c.l.b16 %v861
      %v948 = vunpack.c.h.b16 %v861
      %v949 = vunpack.c.l.b16 %v862
      %v950 = vunpack.c.h.b16 %v862
      %v951 = vunpack.c.l.b16 %v863
      %v952 = vunpack.c.h.b16 %v863
      %v953 = vunpack.c.l.b16 %v864
      %v954 = vunpack.c.h.b16 %v864
      %v955 = vunpack.c.l.b16 %v865
      %v956 = vunpack.c.h.b16 %v865
      %v957 = vunpack.c.l.b16 %v866
      %v958 = vunpack.c.h.b16 %v866
      %v959 = vunpack.c.l.b16 %v867
      %v960 = vunpack.c.h.b16 %v867
      %v961 = vunpack.c.l.b16 %v868
      %v962 = vunpack.c.h.b16 %v868
      %v963 = vunpack.c.l.b16 %v869
      %v964 = vunpack.c.h.b16 %v869
      %v965 = vunpack.c.l.b16 %v870
      %v966 = vunpack.c.h.b16 %v870
      %v967 = vpack.c.b16 %v907, %v903
      %v968 = vpack.c.b16 %v908, %v904
      %v969 = vpack.c.b16 %v909, %v905
      %v970 = vpack.c.b16 %v910, %v906
      %v971 = vpack.c.b16 %v915, %v911
      %v972 = vpack.c.b16 %v916, %v912
      %v973 = vpack.c.b16 %v917, %v913
      %v974 = vpack.c.b16 %v918, %v914
      %v975 = vpack.c.b16 %v923, %v919
      %v976 = vpack.c.b16 %v924, %v920
      %v977 = vpack.c.b16 %v925, %v921
      %v978 = vpack.c.b16 %v926, %v922
      %v979 = vpack.c.b16 %v931, %v927
      %v980 = vpack.c.b16 %v932, %v928
      %v981 = vpack.c.b16 %v933, %v929
      %v982 = vpack.c.b16 %v934, %v930
      %v983 = vpack.c.b16 %v939, %v935
      %v984 = vpack.c.b16 %v940, %v936
      %v985 = vpack.c.b16 %v941, %v937
      %v986 = vpack.c.b16 %v942, %v938
      %v987 = vpack.c.b16 %v947, %v943
      %v988 = vpack.c.b16 %v948, %v944
      %v989 = vpack.c.b16 %v949, %v945
      %v990 = vpack.c.b16 %v950, %v946
      %v991 = vpack.c.b16 %v955, %v951
      %v992 = vpack.c.b16 %v956, %v952
      %v993 = vpack.c.b16 %v957, %v953
      %v994 = vpack.c.b16 %v958, %v954
      %v995 = vpack.c.b16 %v963, %v959
      %v996 = vpack.c.b16 %v964, %v960
      %v997 = vpack.c.b16 %v965, %v961
      %v998 = vpack.c.b16 %v966, %v962
      %1031 = vmatprep.subr.bf16.mxu0 %v968
      %1032 = vmatpush1.bf16.msra.mxu0 %v967
      %1033 = vmatprep.subr.bf16.mxu0 %v972
      %1034 = vmatpush1.bf16.msra.mxu0 %v971
      %1035 = vmatprep.subr.bf16.mxu0 %v976
      %1036 = vmatpush1.bf16.msra.mxu0 %v975
      %1037 = vmatprep.subr.bf16.mxu0 %v980
      %1038 = vmatpush1.bf16.msra.mxu0 %v979
      %1039 = vmatprep.subr.bf16.mxu0 %v984
      %1040 = vmatpush1.bf16.msra.mxu0 %v983
      %1041 = vmatprep.subr.bf16.mxu0 %v988
      %1042 = vmatpush1.bf16.msra.mxu0 %v987
      %1043 = vmatprep.subr.bf16.mxu0 %v992
      %1044 = vmatpush1.bf16.msra.mxu0 %v991
      %1045 = vmatprep.subr.bf16.mxu0 %v996
      %1046 = vmatpush1.bf16.msra.mxu0 %v995
      %1047 = vmatprep.subr.bf16.mxu0 0
      %1048 = vmatpush1.bf16.msra.mxu0 0
      %1049 = vmatprep.subr.bf16.mxu0 0
      %1050 = vmatpush1.bf16.msra.mxu0 0
      %1051 = vmatprep.subr.bf16.mxu0 0
      %1052 = vmatpush1.bf16.msra.mxu0 0
      %1053 = vmatprep.subr.bf16.mxu0 0
      %1054 = vmatpush1.bf16.msra.mxu0 0
      %1055 = vmatprep.subr.bf16.mxu0 0
      %1056 = vmatpush1.bf16.msra.mxu0 0
      %1057 = vmatprep.subr.bf16.mxu0 0
      %1058 = vmatpush1.bf16.msra.mxu0 0
      %1059 = vmatprep.subr.bf16.mxu0 0
      %1060 = vmatpush1.bf16.msra.mxu0 0
      %1061 = vmatprep.subr.bf16.mxu0 0
      %1062 = vmatpush1.bf16.msra.mxu0 0
      %1063 = vmatprep.mubr.bf16.mxu0 0
      %1064 = vmatmul.mubr.bf16.gmra.mrb[0].mxu0 %v838
      %v1065 = vpop.f32.mrb[0].mxu0
      %v1066 = vadd.f32 0.0, %v1065
      %v1067 = vpop.f32.mrb[0].mxu0
      %v1068 = vadd.f32 0.0, %v1067
      %v1069 = vpop.f32.mrb[0].mxu0
      %v1070 = vpop.f32.mrb[0].mxu0
      %1071 = vdwg.mxu0
      %1072 = vmatprep.subr.bf16.mxu0 %v970
      %1073 = vmatpush1.bf16.msra.mxu0 %v969
      %1074 = vmatprep.subr.bf16.mxu0 %v974
      %1075 = vmatpush1.bf16.msra.mxu0 %v973
      %1076 = vmatprep.subr.bf16.mxu0 %v978
      %1077 = vmatpush1.bf16.msra.mxu0 %v977
      %1078 = vmatprep.subr.bf16.mxu0 %v982
      %1079 = vmatpush1.bf16.msra.mxu0 %v981
      %1080 = vmatprep.subr.bf16.mxu0 %v986
      %1081 = vmatpush1.bf16.msra.mxu0 %v985
      %1082 = vmatprep.subr.bf16.mxu0 %v990
      %1083 = vmatpush1.bf16.msra.mxu0 %v989
      %1084 = vmatprep.subr.bf16.mxu0 %v994
      %1085 = vmatpush1.bf16.msra.mxu0 %v993
      %1086 = vmatprep.subr.bf16.mxu0 %v998
      %1087 = vmatpush1.bf16.msra.mxu0 %v997
      %1088 = vmatprep.subr.bf16.mxu0 0
      %1089 = vmatpush1.bf16.msra.mxu0 0
      %1090 = vmatprep.subr.bf16.mxu0 0
      %1091 = vmatpush1.bf16.msra.mxu0 0
      %1092 = vmatprep.subr.bf16.mxu0 0
      %1093 = vmatpush1.bf16.msra.mxu0 0
      %1094 = vmatprep.subr.bf16.mxu0 0
      %1095 = vmatpush1.bf16.msra.mxu0 0
      %1096 = vmatprep.subr.bf16.mxu0 0
      %1097 = vmatpush1.bf16.msra.mxu0 0
      %1098 = vmatprep.subr.bf16.mxu0 0
      %1099 = vmatpush1.bf16.msra.mxu0 0
      %1100 = vmatprep.subr.bf16.mxu0 0
      %1101 = vmatpush1.bf16.msra.mxu0 0
      %1102 = vmatprep.subr.bf16.mxu0 0
      %1103 = vmatpush1.bf16.msra.mxu0 0
      %1104 = vmatprep.mubr.bf16.mxu0 0
      %1105 = vmatmul.mubr.bf16.gmra.mrb[0].mxu0 %v838
      %v1106 = vpop.f32.mrb[0].mxu0
      %v1107 = vadd.f32 0.0, %v1106
      %v1108 = vpop.f32.mrb[0].mxu0
      %v1109 = vadd.f32 0.0, %v1108
      %v1110 = vpop.f32.mrb[0].mxu0
      %v1111 = vpop.f32.mrb[0].mxu0
      %1112 = vdwg.mxu0
      %v1113 = vadd.f32 %v834, %v1066
      %v1114 = vadd.f32 %v835, %v1068
      %v1115 = vadd.f32 %v836, %v1107
      %v1116 = vadd.f32 %v837, %v1109
      %v1117 = vxor.u32 %v1113, 2147483648
      %v1118 = vmul.f32 %v1117, 1.442695
      %v1119 = vpow.pop %v1118
      %v1120 = vadd.f32 %v1119, 1.0
      %v1121 = vrcp.pop %v1120
      %v1122 = vmul.f32 1.0, %v1121
      %v1123 = vxor.u32 %v1114, 2147483648
      %v1124 = vmul.f32 %v1123, 1.442695
      %v1125 = vpow.pop %v1124
      %v1126 = vadd.f32 %v1125, 1.0
      %v1127 = vrcp.pop %v1126
      %v1128 = vmul.f32 1.0, %v1127
      %v1129 = vtanh.pop %v1115
      %v1130 = vxor.u32 %v1116, 2147483648
      %v1131 = vmul.f32 %v1130, 1.442695
      %v1132 = vpow.pop %v1131
      %v1133 = vadd.f32 %v1132, 1.0
      %v1134 = vrcp.pop %v1133
      %v1135 = vmul.f32 1.0, %v1134
      %v1136 = vmul.f32 %v1128, %v828
      %v1137 = vmul.f32 %v1122, %v1129
      %v1138 = vadd.f32 %v1136, %v1137
      %v1139 = vtanh.pop %v1138
      %v1140 = vmul.f32 %v1135, %v1139
      %s1141 = scalar_lea.vmem %s202, 16
      %1142 = vst [vmem:[%s1141] sm:$0xff] %v1140
      %s1143 = scalar_lea.vmem %s196, 96
      %v1144 = vld [vmem:[%s1143] sm:$0xff]
      %v1145 = vld [vmem:[%s1143 + $0x8] sm:$0xff]
      %v1146 = vld [vmem:[%s1143 + $0x10] sm:$0xff]
      %v1147 = vld [vmem:[%s1143 + $0x18] sm:$0xff]
      %v1148 = vpack.c.bf16 %v1140, %v1140
      %v1149 = vld [vmem:[%s3] sm:$0xff]
      %v1150 = vld [vmem:[%s3 + $0x8] sm:$0xff]
      %v1151 = vld [vmem:[%s3 + $0x10] sm:$0xff]
      %v1152 = vld [vmem:[%s3 + $0x18] sm:$0xff]
      %v1153 = vld [vmem:[%s3 + $0x20] sm:$0xff]
      %v1154 = vld [vmem:[%s3 + $0x28] sm:$0xff]
      %v1155 = vld [vmem:[%s3 + $0x30] sm:$0xff]
      %v1156 = vld [vmem:[%s3 + $0x38] sm:$0xff]
      %v1157 = vld [vmem:[%s3 + $0x40] sm:$0xff]
      %v1158 = vld [vmem:[%s3 + $0x48] sm:$0xff]
      %v1159 = vld [vmem:[%s3 + $0x50] sm:$0xff]
      %v1160 = vld [vmem:[%s3 + $0x58] sm:$0xff]
      %v1161 = vld [vmem:[%s3 + $0x60] sm:$0xff]
      %v1162 = vld [vmem:[%s3 + $0x68] sm:$0xff]
      %v1163 = vld [vmem:[%s3 + $0x70] sm:$0xff]
      %v1164 = vld [vmem:[%s3 + $0x78] sm:$0xff]
      %v1165 = vld [vmem:[%s3 + $0x80] sm:$0xff]
      %v1166 = vld [vmem:[%s3 + $0x88] sm:$0xff]
      %v1167 = vld [vmem:[%s3 + $0x90] sm:$0xff]
      %v1168 = vld [vmem:[%s3 + $0x98] sm:$0xff]
      %v1169 = vld [vmem:[%s3 + $0xa0] sm:$0xff]
      %v1170 = vld [vmem:[%s3 + $0xa8] sm:$0xff]
      %v1171 = vld [vmem:[%s3 + $0xb0] sm:$0xff]
      %v1172 = vld [vmem:[%s3 + $0xb8] sm:$0xff]
      %v1173 = vld [vmem:[%s3 + $0xc0] sm:$0xff]
      %v1174 = vld [vmem:[%s3 + $0xc8] sm:$0xff]
      %v1175 = vld [vmem:[%s3 + $0xd0] sm:$0xff]
      %v1176 = vld [vmem:[%s3 + $0xd8] sm:$0xff]
      %v1177 = vld [vmem:[%s3 + $0xe0] sm:$0xff]
      %v1178 = vld [vmem:[%s3 + $0xe8] sm:$0xff]
      %v1179 = vld [vmem:[%s3 + $0xf0] sm:$0xff]
      %v1180 = vld [vmem:[%s3 + $0xf8] sm:$0xff]
      %v1213 = vunpack.c.l.b16 %v1149
      %v1214 = vunpack.c.h.b16 %v1149
      %v1215 = vunpack.c.l.b16 %v1150
      %v1216 = vunpack.c.h.b16 %v1150
      %v1217 = vunpack.c.l.b16 %v1151
      %v1218 = vunpack.c.h.b16 %v1151
      %v1219 = vunpack.c.l.b16 %v1152
      %v1220 = vunpack.c.h.b16 %v1152
      %v1221 = vunpack.c.l.b16 %v1153
      %v1222 = vunpack.c.h.b16 %v1153
      %v1223 = vunpack.c.l.b16 %v1154
      %v1224 = vunpack.c.h.b16 %v1154
      %v1225 = vunpack.c.l.b16 %v1155
      %v1226 = vunpack.c.h.b16 %v1155
      %v1227 = vunpack.c.l.b16 %v1156
      %v1228 = vunpack.c.h.b16 %v1156
      %v1229 = vunpack.c.l.b16 %v1157
      %v1230 = vunpack.c.h.b16 %v1157
      %v1231 = vunpack.c.l.b16 %v1158
      %v1232 = vunpack.c.h.b16 %v1158
      %v1233 = vunpack.c.l.b16 %v1159
      %v1234 = vunpack.c.h.b16 %v1159
      %v1235 = vunpack.c.l.b16 %v1160
      %v1236 = vunpack.c.h.b16 %v1160
      %v1237 = vunpack.c.l.b16 %v1161
      %v1238 = vunpack.c.h.b16 %v1161
      %v1239 = vunpack.c.l.b16 %v1162
      %v1240 = vunpack.c.h.b16 %v1162
      %v1241 = vunpack.c.l.b16 %v1163
      %v1242 = vunpack.c.h.b16 %v1163
      %v1243 = vunpack.c.l.b16 %v1164
      %v1244 = vunpack.c.h.b16 %v1164
      %v1245 = vunpack.c.l.b16 %v1165
      %v1246 = vunpack.c.h.b16 %v1165
      %v1247 = vunpack.c.l.b16 %v1166
      %v1248 = vunpack.c.h.b16 %v1166
      %v1249 = vunpack.c.l.b16 %v1167
      %v1250 = vunpack.c.h.b16 %v1167
      %v1251 = vunpack.c.l.b16 %v1168
      %v1252 = vunpack.c.h.b16 %v1168
      %v1253 = vunpack.c.l.b16 %v1169
      %v1254 = vunpack.c.h.b16 %v1169
      %v1255 = vunpack.c.l.b16 %v1170
      %v1256 = vunpack.c.h.b16 %v1170
      %v1257 = vunpack.c.l.b16 %v1171
      %v1258 = vunpack.c.h.b16 %v1171
      %v1259 = vunpack.c.l.b16 %v1172
      %v1260 = vunpack.c.h.b16 %v1172
      %v1261 = vunpack.c.l.b16 %v1173
      %v1262 = vunpack.c.h.b16 %v1173
      %v1263 = vunpack.c.l.b16 %v1174
      %v1264 = vunpack.c.h.b16 %v1174
      %v1265 = vunpack.c.l.b16 %v1175
      %v1266 = vunpack.c.h.b16 %v1175
      %v1267 = vunpack.c.l.b16 %v1176
      %v1268 = vunpack.c.h.b16 %v1176
      %v1269 = vunpack.c.l.b16 %v1177
      %v1270 = vunpack.c.h.b16 %v1177
      %v1271 = vunpack.c.l.b16 %v1178
      %v1272 = vunpack.c.h.b16 %v1178
      %v1273 = vunpack.c.l.b16 %v1179
      %v1274 = vunpack.c.h.b16 %v1179
      %v1275 = vunpack.c.l.b16 %v1180
      %v1276 = vunpack.c.h.b16 %v1180
      %v1277 = vpack.c.b16 %v1217, %v1213
      %v1278 = vpack.c.b16 %v1218, %v1214
      %v1279 = vpack.c.b16 %v1219, %v1215
      %v1280 = vpack.c.b16 %v1220, %v1216
      %v1281 = vpack.c.b16 %v1225, %v1221
      %v1282 = vpack.c.b16 %v1226, %v1222
      %v1283 = vpack.c.b16 %v1227, %v1223
      %v1284 = vpack.c.b16 %v1228, %v1224
      %v1285 = vpack.c.b16 %v1233, %v1229
      %v1286 = vpack.c.b16 %v1234, %v1230
      %v1287 = vpack.c.b16 %v1235, %v1231
      %v1288 = vpack.c.b16 %v1236, %v1232
      %v1289 = vpack.c.b16 %v1241, %v1237
      %v1290 = vpack.c.b16 %v1242, %v1238
      %v1291 = vpack.c.b16 %v1243, %v1239
      %v1292 = vpack.c.b16 %v1244, %v1240
      %v1293 = vpack.c.b16 %v1249, %v1245
      %v1294 = vpack.c.b16 %v1250, %v1246
      %v1295 = vpack.c.b16 %v1251, %v1247
      %v1296 = vpack.c.b16 %v1252, %v1248
      %v1297 = vpack.c.b16 %v1257, %v1253
      %v1298 = vpack.c.b16 %v1258, %v1254
      %v1299 = vpack.c.b16 %v1259, %v1255
      %v1300 = vpack.c.b16 %v1260, %v1256
      %v1301 = vpack.c.b16 %v1265, %v1261
      %v1302 = vpack.c.b16 %v1266, %v1262
      %v1303 = vpack.c.b16 %v1267, %v1263
      %v1304 = vpack.c.b16 %v1268, %v1264
      %v1305 = vpack.c.b16 %v1273, %v1269
      %v1306 = vpack.c.b16 %v1274, %v1270
      %v1307 = vpack.c.b16 %v1275, %v1271
      %v1308 = vpack.c.b16 %v1276, %v1272
      %1341 = vmatprep.subr.bf16.mxu0 %v1278
      %1342 = vmatpush1.bf16.msra.mxu0 %v1277
      %1343 = vmatprep.subr.bf16.mxu0 %v1282
      %1344 = vmatpush1.bf16.msra.mxu0 %v1281
      %1345 = vmatprep.subr.bf16.mxu0 %v1286
      %1346 = vmatpush1.bf16.msra.mxu0 %v1285
      %1347 = vmatprep.subr.bf16.mxu0 %v1290
      %1348 = vmatpush1.bf16.msra.mxu0 %v1289
      %1349 = vmatprep.subr.bf16.mxu0 %v1294
      %1350 = vmatpush1.bf16.msra.mxu0 %v1293
      %1351 = vmatprep.subr.bf16.mxu0 %v1298
      %1352 = vmatpush1.bf16.msra.mxu0 %v1297
      %1353 = vmatprep.subr.bf16.mxu0 %v1302
      %1354 = vmatpush1.bf16.msra.mxu0 %v1301
      %1355 = vmatprep.subr.bf16.mxu0 %v1306
      %1356 = vmatpush1.bf16.msra.mxu0 %v1305
      %1357 = vmatprep.subr.bf16.mxu0 0
      %1358 = vmatpush1.bf16.msra.mxu0 0
      %1359 = vmatprep.subr.bf16.mxu0 0
      %1360 = vmatpush1.bf16.msra.mxu0 0
      %1361 = vmatprep.subr.bf16.mxu0 0
      %1362 = vmatpush1.bf16.msra.mxu0 0
      %1363 = vmatprep.subr.bf16.mxu0 0
      %1364 = vmatpush1.bf16.msra.mxu0 0
      %1365 = vmatprep.subr.bf16.mxu0 0
      %1366 = vmatpush1.bf16.msra.mxu0 0
      %1367 = vmatprep.subr.bf16.mxu0 0
      %1368 = vmatpush1.bf16.msra.mxu0 0
      %1369 = vmatprep.subr.bf16.mxu0 0
      %1370 = vmatpush1.bf16.msra.mxu0 0
      %1371 = vmatprep.subr.bf16.mxu0 0
      %1372 = vmatpush1.bf16.msra.mxu0 0
      %1373 = vmatprep.mubr.bf16.mxu0 0
      %1374 = vmatmul.mubr.bf16.gmra.mrb[0].mxu0 %v1148
      %v1375 = vpop.f32.mrb[0].mxu0
      %v1376 = vadd.f32 0.0, %v1375
      %v1377 = vpop.f32.mrb[0].mxu0
      %v1378 = vadd.f32 0.0, %v1377
      %v1379 = vpop.f32.mrb[0].mxu0
      %v1380 = vpop.f32.mrb[0].mxu0
      %1381 = vdwg.mxu0
      %1382 = vmatprep.subr.bf16.mxu0 %v1280
      %1383 = vmatpush1.bf16.msra.mxu0 %v1279
      %1384 = vmatprep.subr.bf16.mxu0 %v1284
      %1385 = vmatpush1.bf16.msra.mxu0 %v1283
      %1386 = vmatprep.subr.bf16.mxu0 %v1288
      %1387 = vmatpush1.bf16.msra.mxu0 %v1287
      %1388 = vmatprep.subr.bf16.mxu0 %v1292
      %1389 = vmatpush1.bf16.msra.mxu0 %v1291
      %1390 = vmatprep.subr.bf16.mxu0 %v1296
      %1391 = vmatpush1.bf16.msra.mxu0 %v1295
      %1392 = vmatprep.subr.bf16.mxu0 %v1300
      %1393 = vmatpush1.bf16.msra.mxu0 %v1299
      %1394 = vmatprep.subr.bf16.mxu0 %v1304
      %1395 = vmatpush1.bf16.msra.mxu0 %v1303
      %1396 = vmatprep.subr.bf16.mxu0 %v1308
      %1397 = vmatpush1.bf16.msra.mxu0 %v1307
      %1398 = vmatprep.subr.bf16.mxu0 0
      %1399 = vmatpush1.bf16.msra.mxu0 0
      %1400 = vmatprep.subr.bf16.mxu0 0
      %1401 = vmatpush1.bf16.msra.mxu0 0
      %1402 = vmatprep.subr.bf16.mxu0 0
      %1403 = vmatpush1.bf16.msra.mxu0 0
      %1404 = vmatprep.subr.bf16.mxu0 0
      %1405 = vmatpush1.bf16.msra.mxu0 0
      %1406 = vmatprep.subr.bf16.mxu0 0
      %1407 = vmatpush1.bf16.msra.mxu0 0
      %1408 = vmatprep.subr.bf16.mxu0 0
      %1409 = vmatpush1.bf16.msra.mxu0 0
      %1410 = vmatprep.subr.bf16.mxu0 0
      %1411 = vmatpush1.bf16.msra.mxu0 0
      %1412 = vmatprep.subr.bf16.mxu0 0
      %1413 = vmatpush1.bf16.msra.mxu0 0
      %1414 = vmatprep.mubr.bf16.mxu0 0
      %1415 = vmatmul.mubr.bf16.gmra.mrb[0].mxu0 %v1148
      %v1416 = vpop.f32.mrb[0].mxu0
      %v1417 = vadd.f32 0.0, %v1416
      %v1418 = vpop.f32.mrb[0].mxu0
      %v1419 = vadd.f32 0.0, %v1418
      %v1420 = vpop.f32.mrb[0].mxu0
      %v1421 = vpop.f32.mrb[0].mxu0
      %1422 = vdwg.mxu0
      %v1423 = vadd.f32 %v1144, %v1376
      %v1424 = vadd.f32 %v1145, %v1378
      %v1425 = vadd.f32 %v1146, %v1417
      %v1426 = vadd.f32 %v1147, %v1419
      %v1427 = vxor.u32 %v1423, 2147483648
      %v1428 = vmul.f32 %v1427, 1.442695
      %v1429 = vpow.pop %v1428
      %v1430 = vadd.f32 %v1429, 1.0
      %v1431 = vrcp.pop %v1430
      %v1432 = vmul.f32 1.0, %v1431
      %v1433 = vxor.u32 %v1424, 2147483648
      %v1434 = vmul.f32 %v1433, 1.442695
      %v1435 = vpow.pop %v1434
      %v1436 = vadd.f32 %v1435, 1.0
      %v1437 = vrcp.pop %v1436
      %v1438 = vmul.f32 1.0, %v1437
      %v1439 = vtanh.pop %v1425
      %v1440 = vxor.u32 %v1426, 2147483648
      %v1441 = vmul.f32 %v1440, 1.442695
      %v1442 = vpow.pop %v1441
      %v1443 = vadd.f32 %v1442, 1.0
      %v1444 = vrcp.pop %v1443
      %v1445 = vmul.f32 1.0, %v1444
      %v1446 = vmul.f32 %v1438, %v1138
      %v1447 = vmul.f32 %v1432, %v1439
      %v1448 = vadd.f32 %v1446, %v1447
      %v1449 = vtanh.pop %v1448
      %v1450 = vmul.f32 %v1445, %v1449
      %s1451 = scalar_lea.vmem %s202, 24
      %1452 = vst [vmem:[%s1451] sm:$0xff] %v1450
      %1453 = vst [vmem:[#allocation2] sm:$0xff] %v1450
      %1454 = vst [vmem:[#allocation3] sm:$0xff] %v1448
      %s1455 = smul.u32 4, %s15
      %p1456 = scmp.lt.s32.totalorder %s1455, 7
      %s1457 = scalar_select %p1456, %s1455, 7
      %s1458 = smul.addr %s1457, 8
      %s1459 = scalar_lea.vmem %s4, %s1458
      // Predicated region
      $region41: #{decoder_with_rnn_forward.2} parent=35 // pred_check
        %p1460 = pneg %p122
      $region42: #{decoder_with_rnn_forward.2} parent=35 // pred_check_branch
        %1462 = sbr.rel (%p1460) target = $region44
      $region43: #{decoder_with_rnn_forward.2} parent=35 // pred_region
        %s1463 = smul.u32 4, %s15
      $region44: #{decoder_with_rnn_forward.2} parent=35 // pred_fallthru
        _
    $region36: #{decoder_with_rnn_forward.2} parent=5 // pred_fallthru
      _
    %p1464 = scmp.le.s32.totalorder 2, %s10
    // Predicated region
    $region45: #{decoder_with_rnn_forward.2} parent=5 // pred_check
      %p1465 = pneg %p1464
    $region46: #{decoder_with_rnn_forward.2} parent=5 // pred_check_branch
      %1467 = sbr.rel (%p1465) target = $region48
    $region47: #{decoder_with_rnn_forward.2} parent=5 // pred_region
      %s1468 = ssub.s32 %s10, 2
      // Predicated region
      $region49: #{decoder_with_rnn_forward.2} parent=47 // pred_check
        %p1469 = pneg %p128
      $region50: #{decoder_with_rnn_forward.2} parent=47 // pred_check_branch
        %1471 = sbr.rel (%p1469) target = $region52
      $region51: #{decoder_with_rnn_forward.2} parent=47 // pred_region
        %s1472 = smul.u32 4, %s16
        %p1473 = scmp.lt.s32.totalorder %s1472, 7
        %s1474 = scalar_select %p1473, %s1472, 7
        %s1475 = smul.addr %s1474, 8
        %s1476 = scalar_lea.vmem %s4, %s1475
      $region52: #{decoder_with_rnn_forward.2} parent=47 // pred_fallthru
        _
    $region48: #{decoder_with_rnn_forward.2} parent=5 // pred_fallthru
      _
  $region6: #{decoder_with_rnn_forward.2} parent=0 // loop_footer
    %s14 = sadd.s32 1, %s10
  $region7: #{decoder_with_rnn_forward.2} parent=0 // loop_footer_branch
    %9 = sbr.rel target = $region3
  $region8: #{decoder_with_rnn_forward.2} parent=0 // loop_exit
    _

</llo_original>
